<compile_context>
chip_gen: v7x
topology: tpu7x:2x2x1
jax: 0.10.0
libtpu: 0.0.40
codegen_flags: <defaults>
</compile_context>

<pallas_src>
from functools import partial

import numpy as np
import jax
import jax.numpy as jnp
from jax.experimental import pallas as pl
from jax.experimental.pallas import tpu as pltpu


def _autoreg_flow_kernel(x_ref, ldj_ref, w1_ref, b1_ref, w2_ref, b2_ref,
                         w3_ref, b3_ref, sc_ref, inv_sc_ref,
                         x_out_ref, ldj_out_ref, *, act_dtype):
    """One batch tile, batch-on-lanes layout.

    x_ref   : (NV, TB)  f32   features on sublanes, batch on lanes
    ldj_ref : (1,  TB)  f32
    w*_ref  : bf16 weights in [out, in] orientation (autoregressive masks baked in)
    b*_ref  : (out, 1)  f32
    sc_ref, inv_sc_ref : (NV, 1) f32  precomputed scaling transform
    act_dtype: SiLU dtype (bf16 on v6e/v7x, f32 on v5e and older)
    """
    x = x_ref[...]                                            # (NV, TB) f32

    # ---- masked autoregressive MLP: MXU in bf16, f32 accumulation ----
    h1 = jnp.dot(w1_ref[...], x.astype(jnp.bfloat16),
                 preferred_element_type=jnp.float32) + b1_ref[...]
    h1 = h1.astype(act_dtype)
    h1 = h1 * jax.nn.sigmoid(h1)                              # SiLU
    h2 = jnp.dot(w2_ref[...], h1.astype(jnp.bfloat16),
                 preferred_element_type=jnp.float32) + b2_ref[...]
    h2 = h2.astype(act_dtype)
    h2 = h2 * jax.nn.sigmoid(h2)                              # SiLU
    out = jnp.dot(w3_ref[...], h2.astype(jnp.bfloat16),
                  preferred_element_type=jnp.float32) + b3_ref[...]

    nv = x_ref.shape[0]
    t = out[:nv, :]                                           # translation rows
    s_raw = out[nv:, :]                                       # log-scale rows

    # ---- AffineFlow (use_scaling=True, hard_limit=-1); sc/inv_sc hoisted ----
    s = jnp.tanh(s_raw * inv_sc_ref[...]) * sc_ref[...]       # f32

    x_out_ref[...] = (x + t) * jnp.exp(s)
    ldj_out_ref[...] = ldj_ref[...] - jnp.sum(s, axis=0, keepdims=True)


def _activation_dtype():
    """bf16 SiLU only on chips with a bf16 VPU/EUP path (v6e, v7x)."""
    try:
        kind = jax.devices()[0].device_kind.lower()
    except Exception:  # pragma: no cover
        return jnp.float32
    if any(tag in kind for tag in ("v2", "v3", "v4", "v5")):
        return jnp.float32
    return jnp.bfloat16


def _auto_batch_tile(B, cap=4096):
    """Pick the batch (lane) tile.

    Large tiles amortize the ~600-cycle per-grid-step overhead; clamp to the
    batch so small batches don't compute padding; keep the step count >= 2 and
    even (when possible) so the "parallel" axis splits across both v7x cores.
    The 4096 cap keeps f32 activations + bf16 copies + double-buffered I/O well
    inside the 32 MiB scoped VMEM on every generation (incl. v7x's 64 MiB).
    """
    n_steps = max(1, pl.cdiv(B, cap))
    if B > 128:
        n_steps = max(2, n_steps)
        if n_steps % 2:
            n_steps += 1
    return max(128, pl.cdiv(pl.cdiv(B, n_steps), 128) * 128)


def autoregressive_flow_forward_fm(x_fm, ldj, params, *, tb=None):
    """Feature-major entry (preferred): x_fm (NV, B), ldj (B,).

    Returns (x_out_fm (NV, B), ldj_out (B,)).  No padding, no transposes.
    """
    NV, B = x_fm.shape
    w1, b1, w2, b2, w3, b3, sc, inv_sc = params

    if tb is None:
        tb = _auto_batch_tile(B)
    assert tb % 128 == 0, "batch tile must be lane-aligned (multiple of 128)"
    grid = (pl.cdiv(B, tb),)

    ldj_fm = ldj.reshape(1, B)

    def batch_block(shape):
        # block moves along the lane (batch) axis with the grid
        return pl.BlockSpec(shape, lambda i: (0, i))

    def resident(arr):
        # constant index_map -> fetched once, VMEM-resident across all steps
        return pl.BlockSpec(arr.shape, lambda i: (0, 0))

    kernel = partial(_autoreg_flow_kernel, act_dtype=_activation_dtype())

    x_out_fm, ldj_out_fm = pl.pallas_call(
        kernel,
        grid=grid,
        in_specs=(batch_block((NV, tb)), batch_block((1, tb)),
                  resident(w1), resident(b1),
                  resident(w2), resident(b2),
                  resident(w3), resident(b3),
                  resident(sc), resident(inv_sc)),
        out_specs=(batch_block((NV, tb)), batch_block((1, tb))),
        out_shape=(jax.ShapeDtypeStruct((NV, B), jnp.float32),
                   jax.ShapeDtypeStruct((1, B), jnp.float32)),
        compiler_params=pltpu.CompilerParams(
            dimension_semantics=("parallel",),        # megacore split on v7x
            vmem_limit_bytes=32 * 1024 * 1024),
    )(x_fm, ldj_fm, w1, b1, w2, b2, w3, b3, sc, inv_sc)

    return x_out_fm, ldj_out_fm.reshape(B)


def autoregressive_flow_forward(x, ldj, params, *, tb=None):
    """Batch-major convenience wrapper matching the PyTorch interface:
    x (B, NV), ldj (B,) -> (x_out (B, NV), ldj_out (B,)).

    Prefer `autoregressive_flow_forward_fm` if the surrounding stack can stay
    feature-major -- the two transposes here are the only extra HBM passes.
    """
    x_out_fm, ldj_out = autoregressive_flow_forward_fm(x.T, ldj, params, tb=tb)
    return x_out_fm.T, ldj_out


def init_params(key, num_vars, hidden_per_var, init_std_factor=0.2):
    """Synthetic init mirroring AutoregLinear's masked init (PyTorch [out,in])."""
    NV, H = num_vars, hidden_per_var
    keys = jax.random.split(key, 6)

    def make_mask(inp_per_var, out_per_var, diagonal):
        mask = np.zeros((NV * out_per_var, NV * inp_per_var), np.float32)
        for v in range(NV):
            inp_end = (v + (1 if diagonal else 0)) * inp_per_var
            if inp_end > 0:
                mask[v * out_per_var:(v + 1) * out_per_var, :inp_end] = 1.0
        return jnp.asarray(mask)

    def uniform_init(k, shape, fan_in):
        bound = float(np.sqrt(6.0 / max(fan_in, 1)))
        return jax.random.uniform(k, shape, jnp.float32, -bound, bound)

    m1 = make_mask(1, H, diagonal=False)
    m2 = make_mask(H, H, diagonal=True)
    m3 = make_mask(H, 2, diagonal=True)

    # Layer 1: AutoregLinear(NV, 1, H, diagonal=False)
    w1 = uniform_init(keys[0], (NV * H, NV), NV) * m1
    b1 = jax.random.uniform(keys[1], (NV * H,), jnp.float32, -1.0, 1.0) / np.sqrt(NV)
    # Layer 2: AutoregLinear(NV, H, H, diagonal=True)
    w2 = uniform_init(keys[2], (NV * H, NV * H), NV * H) * m2
    b2 = jax.random.uniform(keys[3], (NV * H,), jnp.float32, -1.0, 1.0) / np.sqrt(NV * H)
    # Layer 3: AutoregLinear(NV, H, 2, diagonal=True, init_first_block_zeros=True,
    #                        init_std_factor=0.2, init_bias_factor=0.0)
    w3 = uniform_init(keys[4], (NV * 2, NV * H), NV * H) * m3
    w3 = w3.at[0:2, :].set(0.0)               # init_first_block_zeros
    w3 = w3 * init_std_factor
    b3 = jnp.zeros((NV * 2,), jnp.float32)    # init_bias_factor = 0.0
    scaling = jnp.zeros((NV,), jnp.float32)   # AffineFlow.scaling
    return w1, b1, w2, b2, w3, b3, scaling


def prepare_kernel_params(nat_params):
    """Layout transform for the kernel: bf16 [out,in] weights, column biases,
    de-interleaved (t, s) rows of layer 3, precomputed scaling transform."""
    w1, b1, w2, b2, w3, b3, scaling = nat_params
    NV = scaling.shape[0]
    perm = np.concatenate([np.arange(0, 2 * NV, 2), np.arange(1, 2 * NV, 2)])
    sc = jnp.tanh(jnp.exp(scaling) / 3.0) * 3.0
    inv_sc = 1.0 / jnp.maximum(sc, 1.0)
    return (w1.astype(jnp.bfloat16), b1.reshape(-1, 1),
            w2.astype(jnp.bfloat16), b2.reshape(-1, 1),
            w3[perm].astype(jnp.bfloat16), b3[perm].reshape(-1, 1),
            sc.reshape(-1, 1), inv_sc.reshape(-1, 1))


def reference_forward(x, ldj, nat_params):
    """Pure-JAX reference (batch-major, same bf16-operand matmul policy)."""
    w1, b1, w2, b2, w3, b3, scaling = nat_params

    def mm(a, w):  # bf16 operands, f32 accumulation, like the kernel
        return jnp.dot(a.astype(jnp.bfloat16), w.T.astype(jnp.bfloat16),
                       preferred_element_type=jnp.float32)

    h = mm(x, w1) + b1
    h = h * jax.nn.sigmoid(h)
    h = mm(h, w2) + b2
    h = h * jax.nn.sigmoid(h)
    out = mm(h, w3) + b3
    t, s = out[:, 0::2], out[:, 1::2]       # unflatten(-1, (-1, 2)).unbind(-1)
    sc = jnp.tanh(jnp.exp(scaling)[None, :] / 3.0) * 3.0
    s = jnp.tanh(s / jnp.maximum(sc, 1.0)) * sc
    return (x + t) * jnp.exp(s), ldj - s.sum(axis=1)


# TODO(synk): AutoregressiveFlow.reverse is an inherently sequential per-variable
# loop (num_vars dependent forward passes); only the forward pass is implemented.

if __name__ == "__main__":
    B, NV, H = 300, 8, 16          # batch, num_vars, hidden_per_var (NV*H = 128)
    key = jax.random.PRNGKey(0)
    k_x, k_l, k_p = jax.random.split(key, 3)

    x = jax.random.normal(k_x, (B, NV), jnp.float32)
    ldj = jax.random.normal(k_l, (B,), jnp.float32)
    nat_params = init_params(k_p, NV, H)
    params = prepare_kernel_params(nat_params)

    # Default (auto) tile: B=300 -> tb=256, a 2-step grid with a ragged last
    # tile -> exercises megacore split + un-padded ragged handling.
    x_out, ldj_out = autoregressive_flow_forward(x, ldj, params)
    jax.block_until_ready((x_out, ldj_out))

    x_ref, ldj_ref = reference_forward(x, ldj, nat_params)
    assert x_out.shape == x.shape and ldj_out.shape == ldj.shape
    assert jnp.allclose(x_out, x_ref, atol=1e-2, rtol=1e-2), "x mismatch"
    assert jnp.allclose(ldj_out, ldj_ref, atol=1e-2, rtol=1e-2), "ldj mismatch"

    print("KERNEL_OK")
</pallas_src>

<mosaic_0001>
module attributes {stable_mosaic.version = 11 : i64} {
  func.func @_autoreg_flow_kernel(%arg0: i32, %arg1: memref<8x256xf32, #tpu.memory_space<vmem>>, %arg2: memref<1x256xf32, #tpu.memory_space<vmem>>, %arg3: memref<128x8xbf16, #tpu.memory_space<vmem>>, %arg4: memref<128x1xf32, #tpu.memory_space<vmem>>, %arg5: memref<128x128xbf16, #tpu.memory_space<vmem>>, %arg6: memref<128x1xf32, #tpu.memory_space<vmem>>, %arg7: memref<16x128xbf16, #tpu.memory_space<vmem>>, %arg8: memref<16x1xf32, #tpu.memory_space<vmem>>, %arg9: memref<8x1xf32, #tpu.memory_space<vmem>>, %arg10: memref<8x1xf32, #tpu.memory_space<vmem>>, %arg11: memref<8x256xf32, #tpu.memory_space<vmem>>, %arg12: memref<1x256xf32, #tpu.memory_space<vmem>>) attributes {dimension_semantics = [#tpu.dimension_semantics<parallel>], iteration_bounds = array<i64: 2>, scalar_prefetch = 0 : i64, scratch_operands = 0 : i64, tpu.core_type = #tpu.core_type<tc>, window_params = [{transform_indices = @transform_0, window_bounds = array<i64: 8, 256>}, {transform_indices = @transform_1, window_bounds = array<i64: 1, 256>}, {pipeline_mode = #tpu.pipeline_mode<synchronous>, transform_indices = @transform_2, window_bounds = array<i64: 128, 8>}, {pipeline_mode = #tpu.pipeline_mode<synchronous>, transform_indices = @transform_3, window_bounds = array<i64: 128, 1>}, {pipeline_mode = #tpu.pipeline_mode<synchronous>, transform_indices = @transform_4, window_bounds = array<i64: 128, 128>}, {pipeline_mode = #tpu.pipeline_mode<synchronous>, transform_indices = @transform_5, window_bounds = array<i64: 128, 1>}, {pipeline_mode = #tpu.pipeline_mode<synchronous>, transform_indices = @transform_6, window_bounds = array<i64: 16, 128>}, {pipeline_mode = #tpu.pipeline_mode<synchronous>, transform_indices = @transform_7, window_bounds = array<i64: 16, 1>}, {pipeline_mode = #tpu.pipeline_mode<synchronous>, transform_indices = @transform_8, window_bounds = array<i64: 8, 1>}, {pipeline_mode = #tpu.pipeline_mode<synchronous>, transform_indices = @transform_9, window_bounds = array<i64: 8, 1>}, {transform_indices = @transform_10, window_bounds = array<i64: 8, 256>}, {transform_indices = @transform_11, window_bounds = array<i64: 1, 256>}]} {
    %c0 = arith.constant 0 : index
    %c0_0 = arith.constant 0 : index
    %0 = vector.load %arg1[%c0, %c0_0] : memref<8x256xf32, #tpu.memory_space<vmem>>, vector<8x256xf32>
    %c0_1 = arith.constant 0 : index
    %c0_2 = arith.constant 0 : index
    %1 = vector.load %arg3[%c0_1, %c0_2] : memref<128x8xbf16, #tpu.memory_space<vmem>>, vector<128x8xbf16>
    %2 = arith.truncf %0 : vector<8x256xf32> to vector<8x256xbf16>
    %cst = arith.constant dense<0.000000e+00> : vector<128x256xf32>
    %3 = tpu.matmul %1, %2, %cst {dimension_numbers = #tpu.dot_dimension_numbers<[1], [0], [0], [1], [0, 0, 1, 1], [], []>} : vector<128x8xbf16>, vector<8x256xbf16>, vector<128x256xf32> -> vector<128x256xf32>
    %c0_3 = arith.constant 0 : index
    %c0_4 = arith.constant 0 : index
    %4 = vector.load %arg4[%c0_3, %c0_4] : memref<128x1xf32, #tpu.memory_space<vmem>>, vector<128x1xf32>
    %5 = vector.broadcast %4 : vector<128x1xf32> to vector<128x256xf32>
    %6 = arith.addf %3, %5 : vector<128x256xf32>
    %7 = arith.truncf %6 : vector<128x256xf32> to vector<128x256xbf16>
    %8 = arith.negf %7 : vector<128x256xbf16>
    %9 = math.exp %8 : vector<128x256xbf16>
    %cst_5 = arith.constant 1.000000e+00 : bf16
    %10 = vector.broadcast %cst_5 : bf16 to vector<128x256xbf16>
    %11 = arith.addf %10, %9 : vector<128x256xbf16>
    %12 = arith.divf %10, %11 : vector<128x256xbf16>
    %13 = arith.mulf %7, %12 : vector<128x256xbf16>
    %c0_6 = arith.constant 0 : index
    %c0_7 = arith.constant 0 : index
    %14 = vector.load %arg5[%c0_6, %c0_7] : memref<128x128xbf16, #tpu.memory_space<vmem>>, vector<128x128xbf16>
    %cst_8 = arith.constant dense<0.000000e+00> : vector<128x256xf32>
    %15 = tpu.matmul %14, %13, %cst_8 {dimension_numbers = #tpu.dot_dimension_numbers<[1], [0], [0], [1], [0, 0, 1, 1], [], []>} : vector<128x128xbf16>, vector<128x256xbf16>, vector<128x256xf32> -> vector<128x256xf32>
    %c0_9 = arith.constant 0 : index
    %c0_10 = arith.constant 0 : index
    %16 = vector.load %arg6[%c0_9, %c0_10] : memref<128x1xf32, #tpu.memory_space<vmem>>, vector<128x1xf32>
    %17 = vector.broadcast %16 : vector<128x1xf32> to vector<128x256xf32>
    %18 = arith.addf %15, %17 : vector<128x256xf32>
    %19 = arith.truncf %18 : vector<128x256xf32> to vector<128x256xbf16>
    %20 = arith.negf %19 : vector<128x256xbf16>
    %21 = math.exp %20 : vector<128x256xbf16>
    %cst_11 = arith.constant 1.000000e+00 : bf16
    %22 = vector.broadcast %cst_11 : bf16 to vector<128x256xbf16>
    %23 = arith.addf %22, %21 : vector<128x256xbf16>
    %24 = arith.divf %22, %23 : vector<128x256xbf16>
    %25 = arith.mulf %19, %24 : vector<128x256xbf16>
    %c0_12 = arith.constant 0 : index
    %c0_13 = arith.constant 0 : index
    %26 = vector.load %arg7[%c0_12, %c0_13] : memref<16x128xbf16, #tpu.memory_space<vmem>>, vector<16x128xbf16>
    %cst_14 = arith.constant dense<0.000000e+00> : vector<16x256xf32>
    %27 = tpu.matmul %26, %25, %cst_14 {dimension_numbers = #tpu.dot_dimension_numbers<[1], [0], [0], [1], [0, 0, 1, 1], [], []>} : vector<16x128xbf16>, vector<128x256xbf16>, vector<16x256xf32> -> vector<16x256xf32>
    %c0_15 = arith.constant 0 : index
    %c0_16 = arith.constant 0 : index
    %28 = vector.load %arg8[%c0_15, %c0_16] : memref<16x1xf32, #tpu.memory_space<vmem>>, vector<16x1xf32>
    %29 = vector.broadcast %28 : vector<16x1xf32> to vector<16x256xf32>
    %30 = arith.addf %27, %29 : vector<16x256xf32>
    %31 = vector.extract_strided_slice %30 {offsets = [0, 0], sizes = [8, 256], strides = [1, 1]} : vector<16x256xf32> to vector<8x256xf32>
    %32 = vector.extract_strided_slice %30 {offsets = [8, 0], sizes = [8, 256], strides = [1, 1]} : vector<16x256xf32> to vector<8x256xf32>
    %c0_17 = arith.constant 0 : index
    %c0_18 = arith.constant 0 : index
    %33 = vector.load %arg10[%c0_17, %c0_18] : memref<8x1xf32, #tpu.memory_space<vmem>>, vector<8x1xf32>
    %34 = vector.broadcast %33 : vector<8x1xf32> to vector<8x256xf32>
    %35 = arith.mulf %32, %34 : vector<8x256xf32>
    %36 = math.tanh %35 : vector<8x256xf32>
    %c0_19 = arith.constant 0 : index
    %c0_20 = arith.constant 0 : index
    %37 = vector.load %arg9[%c0_19, %c0_20] : memref<8x1xf32, #tpu.memory_space<vmem>>, vector<8x1xf32>
    %38 = vector.broadcast %37 : vector<8x1xf32> to vector<8x256xf32>
    %39 = arith.mulf %36, %38 : vector<8x256xf32>
    %40 = arith.addf %0, %31 : vector<8x256xf32>
    %41 = math.exp %39 : vector<8x256xf32>
    %42 = arith.mulf %40, %41 : vector<8x256xf32>
    %c0_21 = arith.constant 0 : index
    %c0_22 = arith.constant 0 : index
    %43 = vector.load %arg11[%c0_21, %c0_22] : memref<8x256xf32, #tpu.memory_space<vmem>>, vector<8x256xf32>
    tpu.vector_store %arg11[%c0_21, %c0_22], %42 {strides = array<i32>} : memref<8x256xf32, #tpu.memory_space<vmem>>, vector<8x256xf32>,
    %c0_23 = arith.constant 0 : index
    %c0_24 = arith.constant 0 : index
    %44 = vector.load %arg2[%c0_23, %c0_24] : memref<1x256xf32, #tpu.memory_space<vmem>>, vector<1x256xf32>
    %cst_25 = arith.constant dense<0.000000e+00> : vector<256xf32>
    %45 = vector.multi_reduction <add>, %39, %cst_25 [0] : vector<8x256xf32> to vector<256xf32>
    %46 = vector.shape_cast %45 : vector<256xf32> to vector<1x256xf32>
    %47 = arith.subf %44, %46 : vector<1x256xf32>
    %c0_26 = arith.constant 0 : index
    %c0_27 = arith.constant 0 : index
    %48 = vector.load %arg12[%c0_26, %c0_27] : memref<1x256xf32, #tpu.memory_space<vmem>>, vector<1x256xf32>
    tpu.vector_store %arg12[%c0_26, %c0_27], %47 {strides = array<i32>} : memref<1x256xf32, #tpu.memory_space<vmem>>, vector<1x256xf32>,
    return
  }
  func.func @transform_0(%arg0: i32) -> (i32, i32) {
    %c0_i32 = arith.constant 0 : i32
    %c0_i32_0 = arith.constant 0 : i32
    return %c0_i32, %arg0 : i32, i32
  }
  func.func @transform_1(%arg0: i32) -> (i32, i32) {
    %c0_i32 = arith.constant 0 : i32
    %c0_i32_0 = arith.constant 0 : i32
    return %c0_i32, %arg0 : i32, i32
  }
  func.func @transform_2(%arg0: i32) -> (i32, i32) {
    %c0_i32 = arith.constant 0 : i32
    %c0_i32_0 = arith.constant 0 : i32
    %c0_i32_1 = arith.constant 0 : i32
    return %c0_i32, %c0_i32_0 : i32, i32
  }
  func.func @transform_3(%arg0: i32) -> (i32, i32) {
    %c0_i32 = arith.constant 0 : i32
    %c0_i32_0 = arith.constant 0 : i32
    %c0_i32_1 = arith.constant 0 : i32
    return %c0_i32, %c0_i32_0 : i32, i32
  }
  func.func @transform_4(%arg0: i32) -> (i32, i32) {
    %c0_i32 = arith.constant 0 : i32
    %c0_i32_0 = arith.constant 0 : i32
    %c0_i32_1 = arith.constant 0 : i32
    return %c0_i32, %c0_i32_0 : i32, i32
  }
  func.func @transform_5(%arg0: i32) -> (i32, i32) {
    %c0_i32 = arith.constant 0 : i32
    %c0_i32_0 = arith.constant 0 : i32
    %c0_i32_1 = arith.constant 0 : i32
    return %c0_i32, %c0_i32_0 : i32, i32
  }
  func.func @transform_6(%arg0: i32) -> (i32, i32) {
    %c0_i32 = arith.constant 0 : i32
    %c0_i32_0 = arith.constant 0 : i32
    %c0_i32_1 = arith.constant 0 : i32
    return %c0_i32, %c0_i32_0 : i32, i32
  }
  func.func @transform_7(%arg0: i32) -> (i32, i32) {
    %c0_i32 = arith.constant 0 : i32
    %c0_i32_0 = arith.constant 0 : i32
    %c0_i32_1 = arith.constant 0 : i32
    return %c0_i32, %c0_i32_0 : i32, i32
  }
  func.func @transform_8(%arg0: i32) -> (i32, i32) {
    %c0_i32 = arith.constant 0 : i32
    %c0_i32_0 = arith.constant 0 : i32
    %c0_i32_1 = arith.constant 0 : i32
    return %c0_i32, %c0_i32_0 : i32, i32
  }
  func.func @transform_9(%arg0: i32) -> (i32, i32) {
    %c0_i32 = arith.constant 0 : i32
    %c0_i32_0 = arith.constant 0 : i32
    %c0_i32_1 = arith.constant 0 : i32
    return %c0_i32, %c0_i32_0 : i32, i32
  }
  func.func @transform_10(%arg0: i32) -> (i32, i32) {
    %c0_i32 = arith.constant 0 : i32
    %c0_i32_0 = arith.constant 0 : i32
    return %c0_i32, %arg0 : i32, i32
  }
  func.func @transform_11(%arg0: i32) -> (i32, i32) {
    %c0_i32 = arith.constant 0 : i32
    %c0_i32_0 = arith.constant 0 : i32
    return %c0_i32, %arg0 : i32, i32
  }
}

</mosaic_0001>

<llo_original>
// kernel: tpu_custom_call.1
$region0: #{tpu_custom_call.1}
  #allocation0 [shape = 'u32[]', space=smem, size = 0x4, offset = 0x4, fixed_abs, tag = 'smem constant byte address 0x4 - core index']
  #allocation1 [shape = 'u32[144,128]{1,0:T(1,128)}', space=vmem, size = 0x12000, scoped, tag = 'internal scratch']
  %s0 = inlined_call_operand.vmem [shape: f32[8,300], index: 0, kind: input, shape index: {}]
  %s1 = inlined_call_operand.vmem [shape: f32[1,300], index: 1, kind: input, shape index: {}]
  %s2 = inlined_call_operand.vmem [shape: bf16[128,8], index: 2, kind: input, shape index: {}]
  %s3 = inlined_call_operand.vmem [shape: f32[128,1], index: 3, kind: input, shape index: {}]
  %s4 = inlined_call_operand.vmem [shape: bf16[128,128], index: 4, kind: input, shape index: {}]
  %s5 = inlined_call_operand.vmem [shape: f32[128,1], index: 5, kind: input, shape index: {}]
  %s6 = inlined_call_operand.vmem [shape: bf16[16,128], index: 6, kind: input, shape index: {}]
  %s7 = inlined_call_operand.vmem [shape: f32[16,1], index: 7, kind: input, shape index: {}]
  %s8 = inlined_call_operand.vmem [shape: f32[8,1], index: 8, kind: input, shape index: {}]
  %s9 = inlined_call_operand.vmem [shape: f32[8,1], index: 9, kind: input, shape index: {}]
  %s10 = inlined_call_operand.hbm [shape: f32[8,300], index: 10, kind: output, shape index: {0}]
  %s11 = inlined_call_operand.hbm [shape: f32[1,300], index: 11, kind: output, shape index: {1}]
  %12 = xla_tuple %s10, %s11
  %s13 = sld [smem:[#allocation0]]
  $region81: #{tpu_custom_call.1} parent=0
    _
  %s15 = ssub.s32 1, %s13
  %s16 = scalar_select 0, %s15, %s13
  $region1: #{tpu_custom_call.1} parent=0
    #allocation2 [shape = 'u8[16384]{0}', space=vmem, size = 0x4000, scoped, tag = 'output window, operand 0']
    #allocation3 [shape = 's32[2]{0}', space=sflag, size = 0x8, scoped, tag = 'scoped memory for tpu_custom_call.1']
    #allocation4 [shape = 'u8[2048]{0}', space=vmem, size = 0x800, scoped, tag = 'output window, operand 1']
    #allocation5 [shape = 's32[2]{0}', space=sflag, size = 0x8, scoped, tag = 'scoped memory for tpu_custom_call.1']
    %17 = vsyncpa [#allocation3], 0
    %s18 = scalar_lea.sflag [#allocation3], 1
    %19 = vsyncpa %s18, 0
    %20 = vsyncpa [#allocation5], 0
    %s21 = scalar_lea.sflag [#allocation5], 1
    %22 = vsyncpa %s21, 0
    loop: start=0, step=1, limit=4
    $region2: #{tpu_custom_call.1} parent=1 // loop_pre_header
      _
    $region3: #{tpu_custom_call.1} parent=1 // loop_header
      %s24 = sphi 0, %s28
      %p25 = scmp.ge.s32.totalorder %s24, 4
      %s34 = sphi 0, %s36
      %s37 = sphi 0, %s34
      %s38 = sphi 0, %s37
      %s54 = sphi 0, %s38
      %s60 = sphi 0, %s62
      %s63 = sphi 0, %s60
      %s64 = sphi 0, %s63
      %s80 = sphi 0, %s64
      %s84 = sphi 0, %s84
      %s86 = sphi 0, %s84
      %s87 = sphi 0, %s86
      %s101 = sphi 0, %s87
      %s105 = sphi 0, %s105
      %s107 = sphi 0, %s105
      %s108 = sphi 0, %s107
      %s122 = sphi 0, %s108
      %s126 = sphi 0, %s126
      %s128 = sphi 0, %s126
      %s129 = sphi 0, %s128
      %s143 = sphi 0, %s129
      %s147 = sphi 0, %s147
      %s149 = sphi 0, %s147
      %s150 = sphi 0, %s149
      %s164 = sphi 0, %s150
      %s168 = sphi 0, %s168
      %s170 = sphi 0, %s168
      %s171 = sphi 0, %s170
      %s185 = sphi 0, %s171
      %s189 = sphi 0, %s189
      %s191 = sphi 0, %s189
      %s192 = sphi 0, %s191
      %s206 = sphi 0, %s192
      %s210 = sphi 0, %s210
      %s212 = sphi 0, %s210
      %s213 = sphi 0, %s212
      %s227 = sphi 0, %s213
      %s231 = sphi 0, %s231
      %s233 = sphi 0, %s231
      %s234 = sphi 0, %s233
      %s248 = sphi 0, %s234
      %s254 = sphi 0, %s256
      %s257 = sphi 0, %s254
      %s258 = sphi 0, %s257
      %s274 = sphi 0, %s258
      %s280 = sphi 0, %s282
      %s283 = sphi 0, %s280
      %s284 = sphi 0, %s283
      %s300 = sphi 0, %s284
    $region4: #{tpu_custom_call.1} parent=1 // loop_header_branch
      %27 = sbr.rel (%p25) target = $region8
    $region5: #{tpu_custom_call.1} parent=1 // loop_body
      %s29 = ssub.s32 %s24, 1
      %s30 = ssub.s32 %s24, 2
      %s31 = sadd.s32 %s24, 1
      %s32 = ssub.s32 %s24, %s31
      %p33 = scmp.eq.s32.totalorder %s32, 0
      %s35 = sadd.s32 %s34, 1
      %s36 = scalar_select %p33, %s34, %s35
      %p39 = pneg %p33
      %p40 = scmp.eq.s32.totalorder %s24, 1
      %p41 = por %p39, %p40
      %p42 = scmp.ne.s32.totalorder %s34, %s37
      %p43 = scmp.eq.s32.totalorder %s24, 0
      %p44 = por %p42, %p43
      %p45 = scmp.ne.s32.totalorder %s34, %s37
      %p46 = scmp.eq.s32.totalorder %s29, 1
      %p47 = por %p45, %p46
      %p48 = scmp.ne.s32.totalorder %s37, %s38
      %p49 = scmp.eq.s32.totalorder %s29, 0
      %p50 = por %p48, %p49
      %p51 = scmp.ne.s32.totalorder %s37, %s38
      %p52 = scmp.eq.s32.totalorder %s30, 1
      %p53 = por %p51, %p52
      %p55 = scmp.ne.s32.totalorder %s38, %s54
      %p56 = scmp.eq.s32.totalorder %s30, 0
      %p57 = por %p55, %p56
      %s58 = ssub.s32 %s24, %s31
      %p59 = scmp.eq.s32.totalorder %s58, 0
      %s61 = sadd.s32 %s60, 1
      %s62 = scalar_select %p59, %s60, %s61
      %p65 = pneg %p59
      %p66 = scmp.eq.s32.totalorder %s24, 1
      %p67 = por %p65, %p66
      %p68 = scmp.ne.s32.totalorder %s60, %s63
      %p69 = scmp.eq.s32.totalorder %s24, 0
      %p70 = por %p68, %p69
      %p71 = scmp.ne.s32.totalorder %s60, %s63
      %p72 = scmp.eq.s32.totalorder %s29, 1
      %p73 = por %p71, %p72
      %p74 = scmp.ne.s32.totalorder %s63, %s64
      %p75 = scmp.eq.s32.totalorder %s29, 0
      %p76 = por %p74, %p75
      %p77 = scmp.ne.s32.totalorder %s63, %s64
      %p78 = scmp.eq.s32.totalorder %s30, 1
      %p79 = por %p77, %p78
      %p81 = scmp.ne.s32.totalorder %s64, %s80
      %p82 = scmp.eq.s32.totalorder %s30, 0
      %p83 = por %p81, %p82
      %s85 = sadd.s32 %s84, 1
      %p88 = scmp.eq.s32.totalorder %s24, 1
      %p89 = scmp.ne.s32.totalorder %s84, %s86
      %p90 = scmp.eq.s32.totalorder %s24, 0
      %p91 = por %p89, %p90
      %p92 = scmp.ne.s32.totalorder %s84, %s86
      %p93 = scmp.eq.s32.totalorder %s29, 1
      %p94 = por %p92, %p93
      %p95 = scmp.ne.s32.totalorder %s86, %s87
      %p96 = scmp.eq.s32.totalorder %s29, 0
      %p97 = por %p95, %p96
      %p98 = scmp.ne.s32.totalorder %s86, %s87
      %p99 = scmp.eq.s32.totalorder %s30, 1
      %p100 = por %p98, %p99
      %p102 = scmp.ne.s32.totalorder %s87, %s101
      %p103 = scmp.eq.s32.totalorder %s30, 0
      %p104 = por %p102, %p103
      %s106 = sadd.s32 %s105, 1
      %p109 = scmp.eq.s32.totalorder %s24, 1
      %p110 = scmp.ne.s32.totalorder %s105, %s107
      %p111 = scmp.eq.s32.totalorder %s24, 0
      %p112 = por %p110, %p111
      %p113 = scmp.ne.s32.totalorder %s105, %s107
      %p114 = scmp.eq.s32.totalorder %s29, 1
      %p115 = por %p113, %p114
      %p116 = scmp.ne.s32.totalorder %s107, %s108
      %p117 = scmp.eq.s32.totalorder %s29, 0
      %p118 = por %p116, %p117
      %p119 = scmp.ne.s32.totalorder %s107, %s108
      %p120 = scmp.eq.s32.totalorder %s30, 1
      %p121 = por %p119, %p120
      %p123 = scmp.ne.s32.totalorder %s108, %s122
      %p124 = scmp.eq.s32.totalorder %s30, 0
      %p125 = por %p123, %p124
      %s127 = sadd.s32 %s126, 1
      %p130 = scmp.eq.s32.totalorder %s24, 1
      %p131 = scmp.ne.s32.totalorder %s126, %s128
      %p132 = scmp.eq.s32.totalorder %s24, 0
      %p133 = por %p131, %p132
      %p134 = scmp.ne.s32.totalorder %s126, %s128
      %p135 = scmp.eq.s32.totalorder %s29, 1
      %p136 = por %p134, %p135
      %p137 = scmp.ne.s32.totalorder %s128, %s129
      %p138 = scmp.eq.s32.totalorder %s29, 0
      %p139 = por %p137, %p138
      %p140 = scmp.ne.s32.totalorder %s128, %s129
      %p141 = scmp.eq.s32.totalorder %s30, 1
      %p142 = por %p140, %p141
      %p144 = scmp.ne.s32.totalorder %s129, %s143
      %p145 = scmp.eq.s32.totalorder %s30, 0
      %p146 = por %p144, %p145
      %s148 = sadd.s32 %s147, 1
      %p151 = scmp.eq.s32.totalorder %s24, 1
      %p152 = scmp.ne.s32.totalorder %s147, %s149
      %p153 = scmp.eq.s32.totalorder %s24, 0
      %p154 = por %p152, %p153
      %p155 = scmp.ne.s32.totalorder %s147, %s149
      %p156 = scmp.eq.s32.totalorder %s29, 1
      %p157 = por %p155, %p156
      %p158 = scmp.ne.s32.totalorder %s149, %s150
      %p159 = scmp.eq.s32.totalorder %s29, 0
      %p160 = por %p158, %p159
      %p161 = scmp.ne.s32.totalorder %s149, %s150
      %p162 = scmp.eq.s32.totalorder %s30, 1
      %p163 = por %p161, %p162
      %p165 = scmp.ne.s32.totalorder %s150, %s164
      %p166 = scmp.eq.s32.totalorder %s30, 0
      %p167 = por %p165, %p166
      %s169 = sadd.s32 %s168, 1
      %p172 = scmp.eq.s32.totalorder %s24, 1
      %p173 = scmp.ne.s32.totalorder %s168, %s170
      %p174 = scmp.eq.s32.totalorder %s24, 0
      %p175 = por %p173, %p174
      %p176 = scmp.ne.s32.totalorder %s168, %s170
      %p177 = scmp.eq.s32.totalorder %s29, 1
      %p178 = por %p176, %p177
      %p179 = scmp.ne.s32.totalorder %s170, %s171
      %p180 = scmp.eq.s32.totalorder %s29, 0
      %p181 = por %p179, %p180
      %p182 = scmp.ne.s32.totalorder %s170, %s171
      %p183 = scmp.eq.s32.totalorder %s30, 1
      %p184 = por %p182, %p183
      %p186 = scmp.ne.s32.totalorder %s171, %s185
      %p187 = scmp.eq.s32.totalorder %s30, 0
      %p188 = por %p186, %p187
      %s190 = sadd.s32 %s189, 1
      %p193 = scmp.eq.s32.totalorder %s24, 1
      %p194 = scmp.ne.s32.totalorder %s189, %s191
      %p195 = scmp.eq.s32.totalorder %s24, 0
      %p196 = por %p194, %p195
      %p197 = scmp.ne.s32.totalorder %s189, %s191
      %p198 = scmp.eq.s32.totalorder %s29, 1
      %p199 = por %p197, %p198
      %p200 = scmp.ne.s32.totalorder %s191, %s192
      %p201 = scmp.eq.s32.totalorder %s29, 0
      %p202 = por %p200, %p201
      %p203 = scmp.ne.s32.totalorder %s191, %s192
      %p204 = scmp.eq.s32.totalorder %s30, 1
      %p205 = por %p203, %p204
      %p207 = scmp.ne.s32.totalorder %s192, %s206
      %p208 = scmp.eq.s32.totalorder %s30, 0
      %p209 = por %p207, %p208
      %s211 = sadd.s32 %s210, 1
      %p214 = scmp.eq.s32.totalorder %s24, 1
      %p215 = scmp.ne.s32.totalorder %s210, %s212
      %p216 = scmp.eq.s32.totalorder %s24, 0
      %p217 = por %p215, %p216
      %p218 = scmp.ne.s32.totalorder %s210, %s212
      %p219 = scmp.eq.s32.totalorder %s29, 1
      %p220 = por %p218, %p219
      %p221 = scmp.ne.s32.totalorder %s212, %s213
      %p222 = scmp.eq.s32.totalorder %s29, 0
      %p223 = por %p221, %p222
      %p224 = scmp.ne.s32.totalorder %s212, %s213
      %p225 = scmp.eq.s32.totalorder %s30, 1
      %p226 = por %p224, %p225
      %p228 = scmp.ne.s32.totalorder %s213, %s227
      %p229 = scmp.eq.s32.totalorder %s30, 0
      %p230 = por %p228, %p229
      %s232 = sadd.s32 %s231, 1
      %p235 = scmp.eq.s32.totalorder %s24, 1
      %p236 = scmp.ne.s32.totalorder %s231, %s233
      %p237 = scmp.eq.s32.totalorder %s24, 0
      %p238 = por %p236, %p237
      %p239 = scmp.ne.s32.totalorder %s231, %s233
      %p240 = scmp.eq.s32.totalorder %s29, 1
      %p241 = por %p239, %p240
      %p242 = scmp.ne.s32.totalorder %s233, %s234
      %p243 = scmp.eq.s32.totalorder %s29, 0
      %p244 = por %p242, %p243
      %p245 = scmp.ne.s32.totalorder %s233, %s234
      %p246 = scmp.eq.s32.totalorder %s30, 1
      %p247 = por %p245, %p246
      %p249 = scmp.ne.s32.totalorder %s234, %s248
      %p250 = scmp.eq.s32.totalorder %s30, 0
      %p251 = por %p249, %p250
      %s252 = ssub.s32 %s24, %s31
      %p253 = scmp.eq.s32.totalorder %s252, 0
      %s255 = sadd.s32 %s254, 1
      %s256 = scalar_select %p253, %s254, %s255
      %p259 = pneg %p253
      %p260 = scmp.eq.s32.totalorder %s24, 1
      %p261 = por %p259, %p260
      %p262 = scmp.ne.s32.totalorder %s254, %s257
      %p263 = scmp.eq.s32.totalorder %s24, 0
      %p264 = por %p262, %p263
      %p265 = scmp.ne.s32.totalorder %s254, %s257
      %p266 = scmp.eq.s32.totalorder %s29, 1
      %p267 = por %p265, %p266
      %p268 = scmp.ne.s32.totalorder %s257, %s258
      %p269 = scmp.eq.s32.totalorder %s29, 0
      %p270 = por %p268, %p269
      %p271 = scmp.ne.s32.totalorder %s257, %s258
      %p272 = scmp.eq.s32.totalorder %s30, 1
      %p273 = por %p271, %p272
      %p275 = scmp.ne.s32.totalorder %s258, %s274
      %p276 = scmp.eq.s32.totalorder %s30, 0
      %p277 = por %p275, %p276
      %s278 = ssub.s32 %s24, %s31
      %p279 = scmp.eq.s32.totalorder %s278, 0
      %s281 = sadd.s32 %s280, 1
      %s282 = scalar_select %p279, %s280, %s281
      %p285 = pneg %p279
      %p286 = scmp.eq.s32.totalorder %s24, 1
      %p287 = por %p285, %p286
      %p288 = scmp.ne.s32.totalorder %s280, %s283
      %p289 = scmp.eq.s32.totalorder %s24, 0
      %p290 = por %p288, %p289
      %p291 = scmp.ne.s32.totalorder %s280, %s283
      %p292 = scmp.eq.s32.totalorder %s29, 1
      %p293 = por %p291, %p292
      %p294 = scmp.ne.s32.totalorder %s283, %s284
      %p295 = scmp.eq.s32.totalorder %s29, 0
      %p296 = por %p294, %p295
      %p297 = scmp.ne.s32.totalorder %s283, %s284
      %p298 = scmp.eq.s32.totalorder %s30, 1
      %p299 = por %p297, %p298
      %p301 = scmp.ne.s32.totalorder %s284, %s300
      %p302 = scmp.eq.s32.totalorder %s30, 0
      %p303 = por %p301, %p302
      %p304 = scmp.le.s32.totalorder 1, %s24
      %p305 = scmp.lt.s32.totalorder %s24, 3
      %p306 = pnand %p304, %p305
      %p307 = pneg %p306
      // Predicated region
      $region9: #{tpu_custom_call.1} parent=5 // pred_check
        _
      $region10: #{tpu_custom_call.1} parent=5 // pred_check_branch
        %309 = sbr.rel (%p306) target = $region12
      $region11: #{tpu_custom_call.1} parent=5 // pred_region
        %s310 = ssub.s32 %s24, 1
        // Predicated region
        $region13: #{tpu_custom_call.1} parent=11 // pred_check
          %p311 = pneg %p97
        $region14: #{tpu_custom_call.1} parent=11 // pred_check_branch
          %313 = sbr.rel (%p311) target = $region16
        $region15: #{tpu_custom_call.1} parent=11 // pred_region
          _
        $region16: #{tpu_custom_call.1} parent=11 // pred_fallthru
          _
        // Predicated region
        $region17: #{tpu_custom_call.1} parent=11 // pred_check
          %p314 = pneg %p118
        $region18: #{tpu_custom_call.1} parent=11 // pred_check_branch
          %316 = sbr.rel (%p314) target = $region20
        $region19: #{tpu_custom_call.1} parent=11 // pred_region
          _
        $region20: #{tpu_custom_call.1} parent=11 // pred_fallthru
          _
        // Predicated region
        $region21: #{tpu_custom_call.1} parent=11 // pred_check
          %p317 = pneg %p139
        $region22: #{tpu_custom_call.1} parent=11 // pred_check_branch
          %319 = sbr.rel (%p317) target = $region24
        $region23: #{tpu_custom_call.1} parent=11 // pred_region
          _
        $region24: #{tpu_custom_call.1} parent=11 // pred_fallthru
          _
        // Predicated region
        $region25: #{tpu_custom_call.1} parent=11 // pred_check
          %p320 = pneg %p160
        $region26: #{tpu_custom_call.1} parent=11 // pred_check_branch
          %322 = sbr.rel (%p320) target = $region28
        $region27: #{tpu_custom_call.1} parent=11 // pred_region
          _
        $region28: #{tpu_custom_call.1} parent=11 // pred_fallthru
          _
        // Predicated region
        $region29: #{tpu_custom_call.1} parent=11 // pred_check
          %p323 = pneg %p181
        $region30: #{tpu_custom_call.1} parent=11 // pred_check_branch
          %325 = sbr.rel (%p323) target = $region32
        $region31: #{tpu_custom_call.1} parent=11 // pred_region
          _
        $region32: #{tpu_custom_call.1} parent=11 // pred_fallthru
          _
        // Predicated region
        $region33: #{tpu_custom_call.1} parent=11 // pred_check
          %p326 = pneg %p202
        $region34: #{tpu_custom_call.1} parent=11 // pred_check_branch
          %328 = sbr.rel (%p326) target = $region36
        $region35: #{tpu_custom_call.1} parent=11 // pred_region
          _
        $region36: #{tpu_custom_call.1} parent=11 // pred_fallthru
          _
        // Predicated region
        $region37: #{tpu_custom_call.1} parent=11 // pred_check
          %p329 = pneg %p223
        $region38: #{tpu_custom_call.1} parent=11 // pred_check_branch
          %331 = sbr.rel (%p329) target = $region40
        $region39: #{tpu_custom_call.1} parent=11 // pred_region
          _
        $region40: #{tpu_custom_call.1} parent=11 // pred_fallthru
          _
        // Predicated region
        $region41: #{tpu_custom_call.1} parent=11 // pred_check
          %p332 = pneg %p244
        $region42: #{tpu_custom_call.1} parent=11 // pred_check_branch
          %334 = sbr.rel (%p332) target = $region44
        $region43: #{tpu_custom_call.1} parent=11 // pred_region
          _
        $region44: #{tpu_custom_call.1} parent=11 // pred_fallthru
          _
      $region12: #{tpu_custom_call.1} parent=5 // pred_fallthru
        _
      %p335 = scmp.lt.s32.totalorder %s24, 2
      // Predicated region
      $region45: #{tpu_custom_call.1} parent=5 // pred_check
        %p336 = pneg %p335
      $region46: #{tpu_custom_call.1} parent=5 // pred_check_branch
        %338 = sbr.rel (%p336) target = $region48
      $region47: #{tpu_custom_call.1} parent=5 // pred_region
        // Predicated region
        $region49: #{tpu_custom_call.1} parent=47 // pred_check
          %p339 = pneg %p44
        $region50: #{tpu_custom_call.1} parent=47 // pred_check_branch
          %341 = sbr.rel (%p339) target = $region52
        $region51: #{tpu_custom_call.1} parent=47 // pred_region
          %s342 = smul.u32 2, %s24
          %s343 = ssub.s32 3, %s342
          %p344 = scmp.lt.s32.totalorder %s343, 2
          %s345 = scalar_select %p344, %s343, 2
          %s346 = smul.u32 128, %s345
          %p347 = scmp.lt.s32.totalorder %s342, 2
          %s348 = scalar_select %p347, %s342, 2
          %s349 = smul.addr %s348, 8
          %s350 = scalar_lea.vmem %s0, %s349
          %s351 = smul.u32 2, %s24
          %s352 = ssub.s32 3, %s351
          %p353 = scmp.lt.s32.totalorder %s352, 2
          %s354 = scalar_select %p353, %s352, 2
          %s355 = smul.u32 128, %s354
        $region52: #{tpu_custom_call.1} parent=47 // pred_fallthru
          _
        // Predicated region
        $region53: #{tpu_custom_call.1} parent=47 // pred_check
          %p356 = pneg %p70
        $region54: #{tpu_custom_call.1} parent=47 // pred_check_branch
          %358 = sbr.rel (%p356) target = $region56
        $region55: #{tpu_custom_call.1} parent=47 // pred_region
          %s359 = smul.u32 2, %s24
          %s360 = ssub.s32 3, %s359
          %p361 = scmp.lt.s32.totalorder %s360, 2
          %s362 = scalar_select %p361, %s360, 2
          %s363 = smul.u32 16, %s362
          %p364 = scmp.lt.s32.totalorder %s359, 2
          %s365 = scalar_select %p364, %s359, 2
          %s366 = scalar_lea.vmem %s1, %s365
          %s367 = smul.u32 2, %s24
          %s368 = ssub.s32 3, %s367
          %p369 = scmp.lt.s32.totalorder %s368, 2
          %s370 = scalar_select %p369, %s368, 2
          %s371 = smul.u32 16, %s370
        $region56: #{tpu_custom_call.1} parent=47 // pred_fallthru
          _
      $region48: #{tpu_custom_call.1} parent=5 // pred_fallthru
        _
      %p372 = scmp.le.s32.totalorder 1, %s24
      %p373 = scmp.lt.s32.totalorder %s24, 3
      %p374 = pnand %p372, %p373
      %p375 = pneg %p374
      // Predicated region
      $region57: #{tpu_custom_call.1} parent=5 // pred_check
        _
      $region58: #{tpu_custom_call.1} parent=5 // pred_check_branch
        %377 = sbr.rel (%p374) target = $region60
      $region59: #{tpu_custom_call.1} parent=5 // pred_region
        %s378 = ssub.s32 %s24, 1
        %s379 = smul.u32 2, %s29
        %s380 = ssub.s32 3, %s379
        %p381 = scmp.lt.s32.totalorder %s380, 2
        %s382 = scalar_select %p381, %s380, 2
        %s383 = smul.u32 128, %s382
        %p384 = scmp.lt.s32.totalorder %s379, 2
        %s385 = scalar_select %p384, %s379, 2
        %s386 = smul.addr %s385, 8
        %s387 = scalar_lea.vmem %s0, %s386
        %p388 = pneg %p50
        %p389 = pneg %p47
        %s390 = smul.u32 2, %s29
        %s391 = ssub.s32 3, %s390
        %p392 = scmp.lt.s32.totalorder %s391, 2
        %s393 = scalar_select %p392, %s391, 2
        %s394 = smul.u32 16, %s393
        %p395 = scmp.lt.s32.totalorder %s390, 2
        %s396 = scalar_select %p395, %s390, 2
        %s397 = scalar_lea.vmem %s1, %s396
        %p398 = pneg %p76
        %p399 = pneg %p73
        %p400 = pneg %p97
        %p401 = pneg %p94
        %p402 = pneg %p118
        %p403 = pneg %p115
        %p404 = pneg %p139
        %p405 = pneg %p136
        %p406 = pneg %p160
        %p407 = pneg %p157
        %p408 = pneg %p181
        %p409 = pneg %p178
        %p410 = pneg %p202
        %p411 = pneg %p199
        %p412 = pneg %p223
        %p413 = pneg %p220
        %p414 = pneg %p244
        %p415 = pneg %p241
        %p416 = pneg %p270
        %p417 = pneg %p267
        %s418 = sand.u32 %s257, 1
        %s419 = scalar_lea.sflag [#allocation3], %s418
        %s420 = sand.u32 %s257, 1
        %s421 = smul.addr %s420, 16
        %s422 = scalar_lea.vmem [#allocation2], %s421
        %p423 = pneg %p296
        %p424 = pneg %p293
        %s425 = sand.u32 %s283, 1
        %s426 = scalar_lea.sflag [#allocation5], %s425
        %s427 = sand.u32 %s283, 1
        %s428 = smul.addr %s427, 2
        %s429 = scalar_lea.vmem [#allocation4], %s428
        %s430 = smul.u32 2, %s29
        %s431 = ssub.s32 3, %s430
        %p432 = scmp.lt.s32.totalorder %s431, 2
        %s433 = scalar_select %p432, %s431, 2
        %s434 = smul.u32 128, %s433
        %p435 = scmp.lt.s32.totalorder %s430, 2
        %s436 = scalar_select %p435, %s430, 2
        %s437 = smul.addr %s436, 8
        %s438 = scalar_lea.vmem %s0, %s437
        %s439 = smul.u32 2, %s29
        %s440 = ssub.s32 3, %s439
        %p441 = scmp.lt.s32.totalorder %s440, 2
        %s442 = scalar_select %p441, %s440, 2
        %s443 = smul.u32 128, %s442
        %s444 = smul.u32 2, %s29
        %s445 = ssub.s32 3, %s444
        %p446 = scmp.lt.s32.totalorder %s445, 2
        %s447 = scalar_select %p446, %s445, 2
        %s448 = smul.u32 16, %s447
        %p449 = scmp.lt.s32.totalorder %s444, 2
        %s450 = scalar_select %p449, %s444, 2
        %s451 = scalar_lea.vmem %s1, %s450
        %s452 = smul.u32 2, %s29
        %s453 = ssub.s32 3, %s452
        %p454 = scmp.lt.s32.totalorder %s453, 2
        %s455 = scalar_select %p454, %s453, 2
        %s456 = smul.u32 16, %s455
        %s457 = smul.u32 2, %s29
        %s458 = ssub.s32 3, %s457
        %p459 = scmp.lt.s32.totalorder %s458, 2
        %s460 = scalar_select %p459, %s458, 2
        %s461 = smul.u32 128, %s460
        %s462 = smul.u32 2, %s29
        %s463 = ssub.s32 3, %s462
        %p464 = scmp.lt.s32.totalorder %s463, 2
        %s465 = scalar_select %p464, %s463, 2
        %s466 = smul.u32 16, %s465
        %v469 = vld [vmem:[%s438] sm:$0xff]
        %v470 = vld [vmem:[%s438 + $0x8] sm:$0xff]
        %v471 = vld [vmem:[%s2] sm:$0xf]
        %v472 = vld [vmem:[%s2 + $0x4] sm:$0xf]
        %v473 = vld [vmem:[%s2 + $0x8] sm:$0xf]
        %v474 = vld [vmem:[%s2 + $0xc] sm:$0xf]
        %v475 = vld [vmem:[%s2 + $0x10] sm:$0xf]
        %v476 = vld [vmem:[%s2 + $0x14] sm:$0xf]
        %v477 = vld [vmem:[%s2 + $0x18] sm:$0xf]
        %v478 = vld [vmem:[%s2 + $0x1c] sm:$0xf]
        %v479 = vld [vmem:[%s2 + $0x20] sm:$0xf]
        %v480 = vld [vmem:[%s2 + $0x24] sm:$0xf]
        %v481 = vld [vmem:[%s2 + $0x28] sm:$0xf]
        %v482 = vld [vmem:[%s2 + $0x2c] sm:$0xf]
        %v483 = vld [vmem:[%s2 + $0x30] sm:$0xf]
        %v484 = vld [vmem:[%s2 + $0x34] sm:$0xf]
        %v485 = vld [vmem:[%s2 + $0x38] sm:$0xf]
        %v486 = vld [vmem:[%s2 + $0x3c] sm:$0xf]
        %v487 = vpack.c.bf16 %v469, %v469
        %v488 = vpack.c.bf16 %v470, %v470
        %v489 = vld [vmem:[%s3] sm:$0xff]
        %v490 = vld [vmem:[%s3 + $0x8] sm:$0xff]
        %v491 = vld [vmem:[%s3 + $0x10] sm:$0xff]
        %v492 = vld [vmem:[%s3 + $0x18] sm:$0xff]
        %v493 = vld [vmem:[%s3 + $0x20] sm:$0xff]
        %v494 = vld [vmem:[%s3 + $0x28] sm:$0xff]
        %v495 = vld [vmem:[%s3 + $0x30] sm:$0xff]
        %v496 = vld [vmem:[%s3 + $0x38] sm:$0xff]
        %v497 = vld [vmem:[%s3 + $0x40] sm:$0xff]
        %v498 = vld [vmem:[%s3 + $0x48] sm:$0xff]
        %v499 = vld [vmem:[%s3 + $0x50] sm:$0xff]
        %v500 = vld [vmem:[%s3 + $0x58] sm:$0xff]
        %v501 = vld [vmem:[%s3 + $0x60] sm:$0xff]
        %v502 = vld [vmem:[%s3 + $0x68] sm:$0xff]
        %v503 = vld [vmem:[%s3 + $0x70] sm:$0xff]
        %v504 = vld [vmem:[%s3 + $0x78] sm:$0xff]
        %506 = vset.pattern.permute.xlu0 0
        %507 = vperm.xlu0 %506, %v489
        %v508 = vpop.permute.xlu0 %507
        %511 = vset.pattern.permute.xlu0 0
        %512 = vperm.xlu0 %511, %v490
        %v513 = vpop.permute.xlu0 %512
        %516 = vset.pattern.permute.xlu0 0
        %517 = vperm.xlu0 %516, %v491
        %v518 = vpop.permute.xlu0 %517
        %521 = vset.pattern.permute.xlu0 0
        %522 = vperm.xlu0 %521, %v492
        %v523 = vpop.permute.xlu0 %522
        %526 = vset.pattern.permute.xlu0 0
        %527 = vperm.xlu0 %526, %v493
        %v528 = vpop.permute.xlu0 %527
        %531 = vset.pattern.permute.xlu0 0
        %532 = vperm.xlu0 %531, %v494
        %v533 = vpop.permute.xlu0 %532
        %536 = vset.pattern.permute.xlu0 0
        %537 = vperm.xlu0 %536, %v495
        %v538 = vpop.permute.xlu0 %537
        %541 = vset.pattern.permute.xlu0 0
        %542 = vperm.xlu0 %541, %v496
        %v543 = vpop.permute.xlu0 %542
        %546 = vset.pattern.permute.xlu0 0
        %547 = vperm.xlu0 %546, %v497
        %v548 = vpop.permute.xlu0 %547
        %551 = vset.pattern.permute.xlu0 0
        %552 = vperm.xlu0 %551, %v498
        %v553 = vpop.permute.xlu0 %552
        %556 = vset.pattern.permute.xlu0 0
        %557 = vperm.xlu0 %556, %v499
        %v558 = vpop.permute.xlu0 %557
        %561 = vset.pattern.permute.xlu0 0
        %562 = vperm.xlu0 %561, %v500
        %v563 = vpop.permute.xlu0 %562
        %566 = vset.pattern.permute.xlu0 0
        %567 = vperm.xlu0 %566, %v501
        %v568 = vpop.permute.xlu0 %567
        %571 = vset.pattern.permute.xlu0 0
        %572 = vperm.xlu0 %571, %v502
        %v573 = vpop.permute.xlu0 %572
        %576 = vset.pattern.permute.xlu0 0
        %577 = vperm.xlu0 %576, %v503
        %v578 = vpop.permute.xlu0 %577
        %581 = vset.pattern.permute.xlu0 0
        %582 = vperm.xlu0 %581, %v504
        %v583 = vpop.permute.xlu0 %582
        %v601 = vunpack.c.l.b16 %v471
        %v602 = vunpack.c.l.b16 %v472
        %v603 = vunpack.c.l.b16 %v473
        %v604 = vunpack.c.l.b16 %v474
        %v605 = vunpack.c.l.b16 %v475
        %v606 = vunpack.c.l.b16 %v476
        %v607 = vunpack.c.l.b16 %v477
        %v608 = vunpack.c.l.b16 %v478
        %v609 = vunpack.c.l.b16 %v479
        %v610 = vunpack.c.l.b16 %v480
        %v611 = vunpack.c.l.b16 %v481
        %v612 = vunpack.c.l.b16 %v482
        %v613 = vunpack.c.l.b16 %v483
        %v614 = vunpack.c.l.b16 %v484
        %v615 = vunpack.c.l.b16 %v485
        %v616 = vunpack.c.l.b16 %v486
        %v617 = vpack.c.b16 %v602, %v601
        %v618 = vpack.c.b16 %v604, %v603
        %v619 = vpack.c.b16 %v606, %v605
        %v620 = vpack.c.b16 %v608, %v607
        %v621 = vpack.c.b16 %v610, %v609
        %v622 = vpack.c.b16 %v612, %v611
        %v623 = vpack.c.b16 %v614, %v613
        %v624 = vpack.c.b16 %v616, %v615
        %vm625 = vcmask 64512
        %v627 = vsel %vm625, %v617, 0
        %v630 = vsel %vm625, %v618, 0
        %v633 = vsel %vm625, %v619, 0
        %v636 = vsel %vm625, %v620, 0
        %v639 = vsel %vm625, %v621, 0
        %v642 = vsel %vm625, %v622, 0
        %v645 = vsel %vm625, %v623, 0
        %v648 = vsel %vm625, %v624, 0
        %vm650 = vcmask 1043456
        %v652 = vsel %vm650, %v487, 0
        %v655 = vsel %vm650, %v488, 0
        %657 = vmatprep.subr.bf16.mxu0 %v655
        %658 = vmatpush1.bf16.msra.mxu0 %v652
        %659 = vmatprep.subr.bf16.mxu0 0
        %660 = vmatpush1.bf16.msra.mxu0 0
        %661 = vmatprep.subr.bf16.mxu0 0
        %662 = vmatpush1.bf16.msra.mxu0 0
        %663 = vmatprep.subr.bf16.mxu0 0
        %664 = vmatpush1.bf16.msra.mxu0 0
        %665 = vmatprep.subr.bf16.mxu0 0
        %666 = vmatpush1.bf16.msra.mxu0 0
        %667 = vmatprep.subr.bf16.mxu0 0
        %668 = vmatpush1.bf16.msra.mxu0 0
        %669 = vmatprep.subr.bf16.mxu0 0
        %670 = vmatpush1.bf16.msra.mxu0 0
        %671 = vmatprep.subr.bf16.mxu0 0
        %672 = vmatpush1.bf16.msra.mxu0 0
        %673 = vmatprep.subr.bf16.mxu0 0
        %674 = vmatpush1.bf16.msra.mxu0 0
        %675 = vmatprep.subr.bf16.mxu0 0
        %676 = vmatpush1.bf16.msra.mxu0 0
        %677 = vmatprep.subr.bf16.mxu0 0
        %678 = vmatpush1.bf16.msra.mxu0 0
        %679 = vmatprep.subr.bf16.mxu0 0
        %680 = vmatpush1.bf16.msra.mxu0 0
        %681 = vmatprep.subr.bf16.mxu0 0
        %682 = vmatpush1.bf16.msra.mxu0 0
        %683 = vmatprep.subr.bf16.mxu0 0
        %684 = vmatpush1.bf16.msra.mxu0 0
        %685 = vmatprep.subr.bf16.mxu0 0
        %686 = vmatpush1.bf16.msra.mxu0 0
        %687 = vmatprep.subr.bf16.mxu0 0
        %688 = vmatpush1.bf16.msra.mxu0 0
        %689 = vmatprep.mubr.bf16.mxu0 0
        %690 = vmatmul.mubr.bf16.gmra.mrb[0].mxu0 %v627
        %v691 = vpop.f32.mrb[0].mxu0
        %v692 = vadd.f32 %v508, %v691
        %v693 = vpop.f32.mrb[0].mxu0
        %v694 = vadd.f32 %v508, %v693
        %v695 = vpop.f32.mrb[0].mxu0
        %v696 = vadd.f32 %v513, %v695
        %v697 = vpop.f32.mrb[0].mxu0
        %v698 = vadd.f32 %v513, %v697
        %699 = vmatprep.mubr.bf16.mxu0 0
        %700 = vmatmul.mubr.bf16.gmra.mrb[0].mxu0 %v630
        %v701 = vpop.f32.mrb[0].mxu0
        %v702 = vadd.f32 %v518, %v701
        %v703 = vpop.f32.mrb[0].mxu0
        %v704 = vadd.f32 %v518, %v703
        %v705 = vpop.f32.mrb[0].mxu0
        %v706 = vadd.f32 %v523, %v705
        %v707 = vpop.f32.mrb[0].mxu0
        %v708 = vadd.f32 %v523, %v707
        %709 = vmatprep.mubr.bf16.mxu0 0
        %710 = vmatmul.mubr.bf16.gmra.mrb[0].mxu0 %v633
        %v711 = vpop.f32.mrb[0].mxu0
        %v712 = vadd.f32 %v528, %v711
        %v713 = vpop.f32.mrb[0].mxu0
        %v714 = vadd.f32 %v528, %v713
        %v715 = vpop.f32.mrb[0].mxu0
        %v716 = vadd.f32 %v533, %v715
        %v717 = vpop.f32.mrb[0].mxu0
        %v718 = vadd.f32 %v533, %v717
        %719 = vmatprep.mubr.bf16.mxu0 0
        %720 = vmatmul.mubr.bf16.gmra.mrb[0].mxu0 %v636
        %v721 = vpop.f32.mrb[0].mxu0
        %v722 = vadd.f32 %v538, %v721
        %v723 = vpop.f32.mrb[0].mxu0
        %v724 = vadd.f32 %v538, %v723
        %v725 = vpop.f32.mrb[0].mxu0
        %v726 = vadd.f32 %v543, %v725
        %v727 = vpop.f32.mrb[0].mxu0
        %v728 = vadd.f32 %v543, %v727
        %729 = vmatprep.mubr.bf16.mxu0 0
        %730 = vmatmul.mubr.bf16.gmra.mrb[0].mxu0 %v639
        %v731 = vpop.f32.mrb[0].mxu0
        %v732 = vadd.f32 %v548, %v731
        %v733 = vpop.f32.mrb[0].mxu0
        %v734 = vadd.f32 %v548, %v733
        %v735 = vpop.f32.mrb[0].mxu0
        %v736 = vadd.f32 %v553, %v735
        %v737 = vpop.f32.mrb[0].mxu0
        %v738 = vadd.f32 %v553, %v737
        %739 = vmatprep.mubr.bf16.mxu0 0
        %740 = vmatmul.mubr.bf16.gmra.mrb[0].mxu0 %v642
        %v741 = vpop.f32.mrb[0].mxu0
        %v742 = vadd.f32 %v558, %v741
        %v743 = vpop.f32.mrb[0].mxu0
        %v744 = vadd.f32 %v558, %v743
        %v745 = vpop.f32.mrb[0].mxu0
        %v746 = vadd.f32 %v563, %v745
        %v747 = vpop.f32.mrb[0].mxu0
        %v748 = vadd.f32 %v563, %v747
        %749 = vmatprep.mubr.bf16.mxu0 0
        %750 = vmatmul.mubr.bf16.gmra.mrb[0].mxu0 %v645
        %v751 = vpop.f32.mrb[0].mxu0
        %v752 = vadd.f32 %v568, %v751
        %v753 = vpop.f32.mrb[0].mxu0
        %v754 = vadd.f32 %v568, %v753
        %v755 = vpop.f32.mrb[0].mxu0
        %v756 = vadd.f32 %v573, %v755
        %v757 = vpop.f32.mrb[0].mxu0
        %v758 = vadd.f32 %v573, %v757
        %759 = vmatprep.mubr.bf16.mxu0 0
        %760 = vmatmul.mubr.bf16.gmra.mrb[0].mxu0 %v648
        %v761 = vpop.f32.mrb[0].mxu0
        %v762 = vadd.f32 %v578, %v761
        %v763 = vpop.f32.mrb[0].mxu0
        %v764 = vadd.f32 %v578, %v763
        %v765 = vpop.f32.mrb[0].mxu0
        %v766 = vadd.f32 %v583, %v765
        %v767 = vpop.f32.mrb[0].mxu0
        %v768 = vadd.f32 %v583, %v767
        %769 = vdwg.mxu0
        %v770 = vpack.c.bf16 %v696, %v692
        %v771 = vpack.c.bf16 %v698, %v694
        %v772 = vpack.c.bf16 %v706, %v702
        %v773 = vpack.c.bf16 %v708, %v704
        %v774 = vpack.c.bf16 %v716, %v712
        %v775 = vpack.c.bf16 %v718, %v714
        %v776 = vpack.c.bf16 %v726, %v722
        %v777 = vpack.c.bf16 %v728, %v724
        %v778 = vpack.c.bf16 %v736, %v732
        %v779 = vpack.c.bf16 %v738, %v734
        %v780 = vpack.c.bf16 %v746, %v742
        %v781 = vpack.c.bf16 %v748, %v744
        %v782 = vpack.c.bf16 %v756, %v752
        %v783 = vpack.c.bf16 %v758, %v754
        %v784 = vpack.c.bf16 %v766, %v762
        %v785 = vpack.c.bf16 %v768, %v764
        %v786 = vxor.u32 %v770, 2147516416
        %v787 = vxor.u32 %v771, 2147516416
        %v788 = vxor.u32 %v772, 2147516416
        %v789 = vxor.u32 %v773, 2147516416
        %v790 = vxor.u32 %v774, 2147516416
        %v791 = vxor.u32 %v775, 2147516416
        %v792 = vxor.u32 %v776, 2147516416
        %v793 = vxor.u32 %v777, 2147516416
        %v794 = vxor.u32 %v778, 2147516416
        %v795 = vxor.u32 %v779, 2147516416
        %v796 = vxor.u32 %v780, 2147516416
        %v797 = vxor.u32 %v781, 2147516416
        %v798 = vxor.u32 %v782, 2147516416
        %v799 = vxor.u32 %v783, 2147516416
        %v800 = vxor.u32 %v784, 2147516416
        %v801 = vxor.u32 %v785, 2147516416
        %v803 = vmul.bf16 %v786, 1069105081
        %v804 = vpow.bf16.pop %v803
        %v806 = vmul.bf16 %v787, 1069105081
        %v807 = vpow.bf16.pop %v806
        %v809 = vmul.bf16 %v788, 1069105081
        %v810 = vpow.bf16.pop %v809
        %v812 = vmul.bf16 %v789, 1069105081
        %v813 = vpow.bf16.pop %v812
        %v815 = vmul.bf16 %v790, 1069105081
        %v816 = vpow.bf16.pop %v815
        %v818 = vmul.bf16 %v791, 1069105081
        %v819 = vpow.bf16.pop %v818
        %v821 = vmul.bf16 %v792, 1069105081
        %v822 = vpow.bf16.pop %v821
        %v824 = vmul.bf16 %v793, 1069105081
        %v825 = vpow.bf16.pop %v824
        %v827 = vmul.bf16 %v794, 1069105081
        %v828 = vpow.bf16.pop %v827
        %v830 = vmul.bf16 %v795, 1069105081
        %v831 = vpow.bf16.pop %v830
        %v833 = vmul.bf16 %v796, 1069105081
        %v834 = vpow.bf16.pop %v833
        %v836 = vmul.bf16 %v797, 1069105081
        %v837 = vpow.bf16.pop %v836
        %v839 = vmul.bf16 %v798, 1069105081
        %v840 = vpow.bf16.pop %v839
        %v842 = vmul.bf16 %v799, 1069105081
        %v843 = vpow.bf16.pop %v842
        %v845 = vmul.bf16 %v800, 1069105081
        %v846 = vpow.bf16.pop %v845
        %v848 = vmul.bf16 %v801, 1069105081
        %v849 = vpow.bf16.pop %v848
        %v850 = vadd.bf16 %v804, 1065369472
        %v851 = vadd.bf16 %v807, 1065369472
        %v852 = vadd.bf16 %v810, 1065369472
        %v853 = vadd.bf16 %v813, 1065369472
        %v854 = vadd.bf16 %v816, 1065369472
        %v855 = vadd.bf16 %v819, 1065369472
        %v856 = vadd.bf16 %v822, 1065369472
        %v857 = vadd.bf16 %v825, 1065369472
        %v858 = vadd.bf16 %v828, 1065369472
        %v859 = vadd.bf16 %v831, 1065369472
        %v860 = vadd.bf16 %v834, 1065369472
        %v861 = vadd.bf16 %v837, 1065369472
        %v862 = vadd.bf16 %v840, 1065369472
        %v863 = vadd.bf16 %v843, 1065369472
        %v864 = vadd.bf16 %v846, 1065369472
        %v865 = vadd.bf16 %v849, 1065369472
        %v866 = vrcp.bf16.pop %v850
        %v867 = vmul.bf16 1065369472, %v866
        %v868 = vrcp.bf16.pop %v851
        %v869 = vmul.bf16 1065369472, %v868
        %v870 = vrcp.bf16.pop %v852
        %v871 = vmul.bf16 1065369472, %v870
        %v872 = vrcp.bf16.pop %v853
        %v873 = vmul.bf16 1065369472, %v872
        %v874 = vrcp.bf16.pop %v854
        %v875 = vmul.bf16 1065369472, %v874
        %v876 = vrcp.bf16.pop %v855
        %v877 = vmul.bf16 1065369472, %v876
        %v878 = vrcp.bf16.pop %v856
        %v879 = vmul.bf16 1065369472, %v878
        %v880 = vrcp.bf16.pop %v857
        %v881 = vmul.bf16 1065369472, %v880
        %v882 = vrcp.bf16.pop %v858
        %v883 = vmul.bf16 1065369472, %v882
        %v884 = vrcp.bf16.pop %v859
        %v885 = vmul.bf16 1065369472, %v884
        %v886 = vrcp.bf16.pop %v860
        %v887 = vmul.bf16 1065369472, %v886
        %v888 = vrcp.bf16.pop %v861
        %v889 = vmul.bf16 1065369472, %v888
        %v890 = vrcp.bf16.pop %v862
        %v891 = vmul.bf16 1065369472, %v890
        %v892 = vrcp.bf16.pop %v863
        %v893 = vmul.bf16 1065369472, %v892
        %v894 = vrcp.bf16.pop %v864
        %v895 = vmul.bf16 1065369472, %v894
        %v896 = vrcp.bf16.pop %v865
        %v897 = vmul.bf16 1065369472, %v896
        %v898 = vmul.bf16 %v770, %v867
        %v899 = vmul.bf16 %v771, %v869
        %v900 = vmul.bf16 %v772, %v871
        %v901 = vmul.bf16 %v773, %v873
        %v902 = vmul.bf16 %v774, %v875
        %v903 = vmul.bf16 %v775, %v877
        %v904 = vmul.bf16 %v776, %v879
        %v905 = vmul.bf16 %v777, %v881
        %v906 = vmul.bf16 %v778, %v883
        %v907 = vmul.bf16 %v779, %v885
        %v908 = vmul.bf16 %v780, %v887
        %v909 = vmul.bf16 %v781, %v889
        %v910 = vmul.bf16 %v782, %v891
        %v911 = vmul.bf16 %v783, %v893
        %v912 = vmul.bf16 %v784, %v895
        %v913 = vmul.bf16 %v785, %v897
        %v914 = vld [vmem:[%s4] sm:$0xf]
        %v915 = vld [vmem:[%s4 + $0x4] sm:$0xf]
        %v916 = vld [vmem:[%s4 + $0x8] sm:$0xf]
        %v917 = vld [vmem:[%s4 + $0xc] sm:$0xf]
        %v918 = vld [vmem:[%s4 + $0x10] sm:$0xf]
        %v919 = vld [vmem:[%s4 + $0x14] sm:$0xf]
        %v920 = vld [vmem:[%s4 + $0x18] sm:$0xf]
        %v921 = vld [vmem:[%s4 + $0x1c] sm:$0xf]
        %v922 = vld [vmem:[%s4 + $0x20] sm:$0xf]
        %v923 = vld [vmem:[%s4 + $0x24] sm:$0xf]
        %v924 = vld [vmem:[%s4 + $0x28] sm:$0xf]
        %v925 = vld [vmem:[%s4 + $0x2c] sm:$0xf]
        %v926 = vld [vmem:[%s4 + $0x30] sm:$0xf]
        %v927 = vld [vmem:[%s4 + $0x34] sm:$0xf]
        %v928 = vld [vmem:[%s4 + $0x38] sm:$0xf]
        %v929 = vld [vmem:[%s4 + $0x3c] sm:$0xf]
        %v930 = vld [vmem:[%s5] sm:$0xff]
        %v931 = vld [vmem:[%s5 + $0x8] sm:$0xff]
        %v932 = vld [vmem:[%s5 + $0x10] sm:$0xff]
        %v933 = vld [vmem:[%s5 + $0x18] sm:$0xff]
        %v934 = vld [vmem:[%s5 + $0x20] sm:$0xff]
        %v935 = vld [vmem:[%s5 + $0x28] sm:$0xff]
        %v936 = vld [vmem:[%s5 + $0x30] sm:$0xff]
        %v937 = vld [vmem:[%s5 + $0x38] sm:$0xff]
        %v938 = vld [vmem:[%s5 + $0x40] sm:$0xff]
        %v939 = vld [vmem:[%s5 + $0x48] sm:$0xff]
        %v940 = vld [vmem:[%s5 + $0x50] sm:$0xff]
        %v941 = vld [vmem:[%s5 + $0x58] sm:$0xff]
        %v942 = vld [vmem:[%s5 + $0x60] sm:$0xff]
        %v943 = vld [vmem:[%s5 + $0x68] sm:$0xff]
        %v944 = vld [vmem:[%s5 + $0x70] sm:$0xff]
        %v945 = vld [vmem:[%s5 + $0x78] sm:$0xff]
        %947 = vset.pattern.permute.xlu0 0
        %948 = vperm.xlu0 %947, %v930
        %v949 = vpop.permute.xlu0 %948
        %952 = vset.pattern.permute.xlu0 0
        %953 = vperm.xlu0 %952, %v931
        %v954 = vpop.permute.xlu0 %953
        %957 = vset.pattern.permute.xlu0 0
        %958 = vperm.xlu0 %957, %v932
        %v959 = vpop.permute.xlu0 %958
        %962 = vset.pattern.permute.xlu0 0
        %963 = vperm.xlu0 %962, %v933
        %v964 = vpop.permute.xlu0 %963
        %967 = vset.pattern.permute.xlu0 0
        %968 = vperm.xlu0 %967, %v934
        %v969 = vpop.permute.xlu0 %968
        %972 = vset.pattern.permute.xlu0 0
        %973 = vperm.xlu0 %972, %v935
        %v974 = vpop.permute.xlu0 %973
        %977 = vset.pattern.permute.xlu0 0
        %978 = vperm.xlu0 %977, %v936
        %v979 = vpop.permute.xlu0 %978
        %982 = vset.pattern.permute.xlu0 0
        %983 = vperm.xlu0 %982, %v937
        %v984 = vpop.permute.xlu0 %983
        %987 = vset.pattern.permute.xlu0 0
        %988 = vperm.xlu0 %987, %v938
        %v989 = vpop.permute.xlu0 %988
        %992 = vset.pattern.permute.xlu0 0
        %993 = vperm.xlu0 %992, %v939
        %v994 = vpop.permute.xlu0 %993
        %997 = vset.pattern.permute.xlu0 0
        %998 = vperm.xlu0 %997, %v940
        %v999 = vpop.permute.xlu0 %998
        %1002 = vset.pattern.permute.xlu0 0
        %1003 = vperm.xlu0 %1002, %v941
        %v1004 = vpop.permute.xlu0 %1003
        %1007 = vset.pattern.permute.xlu0 0
        %1008 = vperm.xlu0 %1007, %v942
        %v1009 = vpop.permute.xlu0 %1008
        %1012 = vset.pattern.permute.xlu0 0
        %1013 = vperm.xlu0 %1012, %v943
        %v1014 = vpop.permute.xlu0 %1013
        %1017 = vset.pattern.permute.xlu0 0
        %1018 = vperm.xlu0 %1017, %v944
        %v1019 = vpop.permute.xlu0 %1018
        %1022 = vset.pattern.permute.xlu0 0
        %1023 = vperm.xlu0 %1022, %v945
        %v1024 = vpop.permute.xlu0 %1023
        %v1042 = vunpack.c.l.b16 %v914
        %v1043 = vunpack.c.l.b16 %v915
        %v1044 = vunpack.c.l.b16 %v916
        %v1045 = vunpack.c.l.b16 %v917
        %v1046 = vunpack.c.l.b16 %v918
        %v1047 = vunpack.c.l.b16 %v919
        %v1048 = vunpack.c.l.b16 %v920
        %v1049 = vunpack.c.l.b16 %v921
        %v1050 = vunpack.c.l.b16 %v922
        %v1051 = vunpack.c.l.b16 %v923
        %v1052 = vunpack.c.l.b16 %v924
        %v1053 = vunpack.c.l.b16 %v925
        %v1054 = vunpack.c.l.b16 %v926
        %v1055 = vunpack.c.l.b16 %v927
        %v1056 = vunpack.c.l.b16 %v928
        %v1057 = vunpack.c.l.b16 %v929
        %v1058 = vpack.c.b16 %v1043, %v1042
        %v1059 = vpack.c.b16 %v1045, %v1044
        %v1060 = vpack.c.b16 %v1047, %v1046
        %v1061 = vpack.c.b16 %v1049, %v1048
        %v1062 = vpack.c.b16 %v1051, %v1050
        %v1063 = vpack.c.b16 %v1053, %v1052
        %v1064 = vpack.c.b16 %v1055, %v1054
        %v1065 = vpack.c.b16 %v1057, %v1056
        %1074 = vmatprep.subr.bf16.mxu0 %v899
        %1075 = vmatpush1.bf16.msra.mxu0 %v898
        %1076 = vmatprep.subr.bf16.mxu0 %v901
        %1077 = vmatpush1.bf16.msra.mxu0 %v900
        %1078 = vmatprep.subr.bf16.mxu0 %v903
        %1079 = vmatpush1.bf16.msra.mxu0 %v902
        %1080 = vmatprep.subr.bf16.mxu0 %v905
        %1081 = vmatpush1.bf16.msra.mxu0 %v904
        %1082 = vmatprep.subr.bf16.mxu0 %v907
        %1083 = vmatpush1.bf16.msra.mxu0 %v906
        %1084 = vmatprep.subr.bf16.mxu0 %v909
        %1085 = vmatpush1.bf16.msra.mxu0 %v908
        %1086 = vmatprep.subr.bf16.mxu0 %v911
        %1087 = vmatpush1.bf16.msra.mxu0 %v910
        %1088 = vmatprep.subr.bf16.mxu0 %v913
        %1089 = vmatpush1.bf16.msra.mxu0 %v912
        %1090 = vmatprep.subr.bf16.mxu0 0
        %1091 = vmatpush1.bf16.msra.mxu0 0
        %1092 = vmatprep.subr.bf16.mxu0 0
        %1093 = vmatpush1.bf16.msra.mxu0 0
        %1094 = vmatprep.subr.bf16.mxu0 0
        %1095 = vmatpush1.bf16.msra.mxu0 0
        %1096 = vmatprep.subr.bf16.mxu0 0
        %1097 = vmatpush1.bf16.msra.mxu0 0
        %1098 = vmatprep.subr.bf16.mxu0 0
        %1099 = vmatpush1.bf16.msra.mxu0 0
        %1100 = vmatprep.subr.bf16.mxu0 0
        %1101 = vmatpush1.bf16.msra.mxu0 0
        %1102 = vmatprep.subr.bf16.mxu0 0
        %1103 = vmatpush1.bf16.msra.mxu0 0
        %1104 = vmatprep.subr.bf16.mxu0 0
        %1105 = vmatpush1.bf16.msra.mxu0 0
        %1106 = vmatprep.mubr.bf16.mxu0 0
        %1107 = vmatmul.mubr.bf16.gmra.mrb[0].mxu0 %v1058
        %v1108 = vpop.f32.mrb[0].mxu0
        %v1109 = vadd.f32 %v949, %v1108
        %v1110 = vpop.f32.mrb[0].mxu0
        %v1111 = vadd.f32 %v949, %v1110
        %v1112 = vpop.f32.mrb[0].mxu0
        %v1113 = vadd.f32 %v954, %v1112
        %v1114 = vpop.f32.mrb[0].mxu0
        %v1115 = vadd.f32 %v954, %v1114
        %1116 = vmatprep.mubr.bf16.mxu0 0
        %1117 = vmatmul.mubr.bf16.gmra.mrb[0].mxu0 %v1059
        %v1118 = vpop.f32.mrb[0].mxu0
        %v1119 = vadd.f32 %v959, %v1118
        %v1120 = vpop.f32.mrb[0].mxu0
        %v1121 = vadd.f32 %v959, %v1120
        %v1122 = vpop.f32.mrb[0].mxu0
        %v1123 = vadd.f32 %v964, %v1122
        %v1124 = vpop.f32.mrb[0].mxu0
        %v1125 = vadd.f32 %v964, %v1124
        %1126 = vmatprep.mubr.bf16.mxu0 0
        %1127 = vmatmul.mubr.bf16.gmra.mrb[0].mxu0 %v1060
        %v1128 = vpop.f32.mrb[0].mxu0
        %v1129 = vadd.f32 %v969, %v1128
        %v1130 = vpop.f32.mrb[0].mxu0
        %v1131 = vadd.f32 %v969, %v1130
        %v1132 = vpop.f32.mrb[0].mxu0
        %v1133 = vadd.f32 %v974, %v1132
        %v1134 = vpop.f32.mrb[0].mxu0
        %v1135 = vadd.f32 %v974, %v1134
        %1136 = vmatprep.mubr.bf16.mxu0 0
        %1137 = vmatmul.mubr.bf16.gmra.mrb[0].mxu0 %v1061
        %v1138 = vpop.f32.mrb[0].mxu0
        %v1139 = vadd.f32 %v979, %v1138
        %v1140 = vpop.f32.mrb[0].mxu0
        %v1141 = vadd.f32 %v979, %v1140
        %v1142 = vpop.f32.mrb[0].mxu0
        %v1143 = vadd.f32 %v984, %v1142
        %v1144 = vpop.f32.mrb[0].mxu0
        %v1145 = vadd.f32 %v984, %v1144
        %1146 = vmatprep.mubr.bf16.mxu0 0
        %1147 = vmatmul.mubr.bf16.gmra.mrb[0].mxu0 %v1062
        %v1148 = vpop.f32.mrb[0].mxu0
        %v1149 = vadd.f32 %v989, %v1148
        %v1150 = vpop.f32.mrb[0].mxu0
        %v1151 = vadd.f32 %v989, %v1150
        %v1152 = vpop.f32.mrb[0].mxu0
        %v1153 = vadd.f32 %v994, %v1152
        %v1154 = vpop.f32.mrb[0].mxu0
        %v1155 = vadd.f32 %v994, %v1154
        %1156 = vmatprep.mubr.bf16.mxu0 0
        %1157 = vmatmul.mubr.bf16.gmra.mrb[0].mxu0 %v1063
        %v1158 = vpop.f32.mrb[0].mxu0
        %v1159 = vadd.f32 %v999, %v1158
        %v1160 = vpop.f32.mrb[0].mxu0
        %v1161 = vadd.f32 %v999, %v1160
        %v1162 = vpop.f32.mrb[0].mxu0
        %v1163 = vadd.f32 %v1004, %v1162
        %v1164 = vpop.f32.mrb[0].mxu0
        %v1165 = vadd.f32 %v1004, %v1164
        %1166 = vmatprep.mubr.bf16.mxu0 0
        %1167 = vmatmul.mubr.bf16.gmra.mrb[0].mxu0 %v1064
        %v1168 = vpop.f32.mrb[0].mxu0
        %v1169 = vadd.f32 %v1009, %v1168
        %v1170 = vpop.f32.mrb[0].mxu0
        %v1171 = vadd.f32 %v1009, %v1170
        %v1172 = vpop.f32.mrb[0].mxu0
        %v1173 = vadd.f32 %v1014, %v1172
        %v1174 = vpop.f32.mrb[0].mxu0
        %v1175 = vadd.f32 %v1014, %v1174
        %1176 = vmatprep.mubr.bf16.mxu0 0
        %1177 = vmatmul.mubr.bf16.gmra.mrb[0].mxu0 %v1065
        %v1178 = vpop.f32.mrb[0].mxu0
        %v1179 = vadd.f32 %v1019, %v1178
        %v1180 = vpop.f32.mrb[0].mxu0
        %v1181 = vadd.f32 %v1019, %v1180
        %v1182 = vpop.f32.mrb[0].mxu0
        %v1183 = vadd.f32 %v1024, %v1182
        %v1184 = vpop.f32.mrb[0].mxu0
        %v1185 = vadd.f32 %v1024, %v1184
        %1186 = vdwg.mxu0
        %v1187 = vpack.c.bf16 %v1113, %v1109
        %v1188 = vpack.c.bf16 %v1115, %v1111
        %v1189 = vpack.c.bf16 %v1123, %v1119
        %v1190 = vpack.c.bf16 %v1125, %v1121
        %v1191 = vpack.c.bf16 %v1133, %v1129
        %v1192 = vpack.c.bf16 %v1135, %v1131
        %v1193 = vpack.c.bf16 %v1143, %v1139
        %v1194 = vpack.c.bf16 %v1145, %v1141
        %v1195 = vpack.c.bf16 %v1153, %v1149
        %v1196 = vpack.c.bf16 %v1155, %v1151
        %v1197 = vpack.c.bf16 %v1163, %v1159
        %v1198 = vpack.c.bf16 %v1165, %v1161
        %v1199 = vpack.c.bf16 %v1173, %v1169
        %v1200 = vpack.c.bf16 %v1175, %v1171
        %v1201 = vpack.c.bf16 %v1183, %v1179
        %v1202 = vpack.c.bf16 %v1185, %v1181
        %v1203 = vxor.u32 %v1187, 2147516416
        %v1204 = vxor.u32 %v1188, 2147516416
        %v1205 = vxor.u32 %v1189, 2147516416
        %v1206 = vxor.u32 %v1190, 2147516416
        %v1207 = vxor.u32 %v1191, 2147516416
        %v1208 = vxor.u32 %v1192, 2147516416
        %v1209 = vxor.u32 %v1193, 2147516416
        %v1210 = vxor.u32 %v1194, 2147516416
        %v1211 = vxor.u32 %v1195, 2147516416
        %v1212 = vxor.u32 %v1196, 2147516416
        %v1213 = vxor.u32 %v1197, 2147516416
        %v1214 = vxor.u32 %v1198, 2147516416
        %v1215 = vxor.u32 %v1199, 2147516416
        %v1216 = vxor.u32 %v1200, 2147516416
        %v1217 = vxor.u32 %v1201, 2147516416
        %v1218 = vxor.u32 %v1202, 2147516416
        %v1220 = vmul.bf16 %v1203, 1069105081
        %v1221 = vpow.bf16.pop %v1220
        %v1223 = vmul.bf16 %v1204, 1069105081
        %v1224 = vpow.bf16.pop %v1223
        %v1226 = vmul.bf16 %v1205, 1069105081
        %v1227 = vpow.bf16.pop %v1226
        %v1229 = vmul.bf16 %v1206, 1069105081
        %v1230 = vpow.bf16.pop %v1229
        %v1232 = vmul.bf16 %v1207, 1069105081
        %v1233 = vpow.bf16.pop %v1232
        %v1235 = vmul.bf16 %v1208, 1069105081
        %v1236 = vpow.bf16.pop %v1235
        %v1238 = vmul.bf16 %v1209, 1069105081
        %v1239 = vpow.bf16.pop %v1238
        %v1241 = vmul.bf16 %v1210, 1069105081
        %v1242 = vpow.bf16.pop %v1241
        %v1244 = vmul.bf16 %v1211, 1069105081
        %v1245 = vpow.bf16.pop %v1244
        %v1247 = vmul.bf16 %v1212, 1069105081
        %v1248 = vpow.bf16.pop %v1247
        %v1250 = vmul.bf16 %v1213, 1069105081
        %v1251 = vpow.bf16.pop %v1250
        %v1253 = vmul.bf16 %v1214, 1069105081
        %v1254 = vpow.bf16.pop %v1253
        %v1256 = vmul.bf16 %v1215, 1069105081
        %v1257 = vpow.bf16.pop %v1256
        %v1259 = vmul.bf16 %v1216, 1069105081
        %v1260 = vpow.bf16.pop %v1259
        %v1262 = vmul.bf16 %v1217, 1069105081
        %v1263 = vpow.bf16.pop %v1262
        %v1265 = vmul.bf16 %v1218, 1069105081
        %v1266 = vpow.bf16.pop %v1265
        %v1267 = vadd.bf16 %v1221, 1065369472
        %v1268 = vadd.bf16 %v1224, 1065369472
        %v1269 = vadd.bf16 %v1227, 1065369472
        %v1270 = vadd.bf16 %v1230, 1065369472
        %v1271 = vadd.bf16 %v1233, 1065369472
        %v1272 = vadd.bf16 %v1236, 1065369472
        %v1273 = vadd.bf16 %v1239, 1065369472
        %v1274 = vadd.bf16 %v1242, 1065369472
        %v1275 = vadd.bf16 %v1245, 1065369472
        %v1276 = vadd.bf16 %v1248, 1065369472
        %v1277 = vadd.bf16 %v1251, 1065369472
        %v1278 = vadd.bf16 %v1254, 1065369472
        %v1279 = vadd.bf16 %v1257, 1065369472
        %v1280 = vadd.bf16 %v1260, 1065369472
        %v1281 = vadd.bf16 %v1263, 1065369472
        %v1282 = vadd.bf16 %v1266, 1065369472
        %v1283 = vrcp.bf16.pop %v1267
        %v1284 = vmul.bf16 1065369472, %v1283
        %v1285 = vrcp.bf16.pop %v1268
        %v1286 = vmul.bf16 1065369472, %v1285
        %v1287 = vrcp.bf16.pop %v1269
        %v1288 = vmul.bf16 1065369472, %v1287
        %v1289 = vrcp.bf16.pop %v1270
        %v1290 = vmul.bf16 1065369472, %v1289
        %v1291 = vrcp.bf16.pop %v1271
        %v1292 = vmul.bf16 1065369472, %v1291
        %v1293 = vrcp.bf16.pop %v1272
        %v1294 = vmul.bf16 1065369472, %v1293
        %v1295 = vrcp.bf16.pop %v1273
        %v1296 = vmul.bf16 1065369472, %v1295
        %v1297 = vrcp.bf16.pop %v1274
        %v1298 = vmul.bf16 1065369472, %v1297
        %v1299 = vrcp.bf16.pop %v1275
        %v1300 = vmul.bf16 1065369472, %v1299
        %v1301 = vrcp.bf16.pop %v1276
        %v1302 = vmul.bf16 1065369472, %v1301
        %v1303 = vrcp.bf16.pop %v1277
        %v1304 = vmul.bf16 1065369472, %v1303
        %v1305 = vrcp.bf16.pop %v1278
        %v1306 = vmul.bf16 1065369472, %v1305
        %v1307 = vrcp.bf16.pop %v1279
        %v1308 = vmul.bf16 1065369472, %v1307
        %v1309 = vrcp.bf16.pop %v1280
        %v1310 = vmul.bf16 1065369472, %v1309
        %v1311 = vrcp.bf16.pop %v1281
        %v1312 = vmul.bf16 1065369472, %v1311
        %v1313 = vrcp.bf16.pop %v1282
        %v1314 = vmul.bf16 1065369472, %v1313
        %v1315 = vmul.bf16 %v1187, %v1284
        %v1316 = vmul.bf16 %v1188, %v1286
        %v1317 = vmul.bf16 %v1189, %v1288
        %v1318 = vmul.bf16 %v1190, %v1290
        %v1319 = vmul.bf16 %v1191, %v1292
        %v1320 = vmul.bf16 %v1192, %v1294
        %v1321 = vmul.bf16 %v1193, %v1296
        %v1322 = vmul.bf16 %v1194, %v1298
        %v1323 = vmul.bf16 %v1195, %v1300
        %v1324 = vmul.bf16 %v1196, %v1302
        %v1325 = vmul.bf16 %v1197, %v1304
        %v1326 = vmul.bf16 %v1198, %v1306
        %v1327 = vmul.bf16 %v1199, %v1308
        %v1328 = vmul.bf16 %v1200, %v1310
        %v1329 = vmul.bf16 %v1201, %v1312
        %v1330 = vmul.bf16 %v1202, %v1314
        %v1331 = vld [vmem:[%s6] sm:$0xf]
        %v1332 = vld [vmem:[%s6 + $0x4] sm:$0xf]
        %v1333 = vld [vmem:[%s7] sm:$0xff]
        %v1334 = vld [vmem:[%s7 + $0x8] sm:$0xff]
        %1336 = vset.pattern.permute.xlu0 0
        %1337 = vperm.xlu0 %1336, %v1333
        %v1338 = vpop.permute.xlu0 %1337
        %1341 = vset.pattern.permute.xlu0 0
        %1342 = vperm.xlu0 %1341, %v1334
        %v1343 = vpop.permute.xlu0 %1342
        %v1347 = vunpack.c.l.b16 %v1331
        %v1348 = vunpack.c.l.b16 %v1332
        %v1349 = vpack.c.b16 %v1348, %v1347
        %1351 = vmatprep.subr.bf16.mxu0 %v1316
        %1352 = vmatpush1.bf16.msra.mxu0 %v1315
        %1353 = vmatprep.subr.bf16.mxu0 %v1318
        %1354 = vmatpush1.bf16.msra.mxu0 %v1317
        %1355 = vmatprep.subr.bf16.mxu0 %v1320
        %1356 = vmatpush1.bf16.msra.mxu0 %v1319
        %1357 = vmatprep.subr.bf16.mxu0 %v1322
        %1358 = vmatpush1.bf16.msra.mxu0 %v1321
        %1359 = vmatprep.subr.bf16.mxu0 %v1324
        %1360 = vmatpush1.bf16.msra.mxu0 %v1323
        %1361 = vmatprep.subr.bf16.mxu0 %v1326
        %1362 = vmatpush1.bf16.msra.mxu0 %v1325
        %1363 = vmatprep.subr.bf16.mxu0 %v1328
        %1364 = vmatpush1.bf16.msra.mxu0 %v1327
        %1365 = vmatprep.subr.bf16.mxu0 %v1330
        %1366 = vmatpush1.bf16.msra.mxu0 %v1329
        %1367 = vmatprep.subr.bf16.mxu0 0
        %1368 = vmatpush1.bf16.msra.mxu0 0
        %1369 = vmatprep.subr.bf16.mxu0 0
        %1370 = vmatpush1.bf16.msra.mxu0 0
        %1371 = vmatprep.subr.bf16.mxu0 0
        %1372 = vmatpush1.bf16.msra.mxu0 0
        %1373 = vmatprep.subr.bf16.mxu0 0
        %1374 = vmatpush1.bf16.msra.mxu0 0
        %1375 = vmatprep.subr.bf16.mxu0 0
        %1376 = vmatpush1.bf16.msra.mxu0 0
        %1377 = vmatprep.subr.bf16.mxu0 0
        %1378 = vmatpush1.bf16.msra.mxu0 0
        %1379 = vmatprep.subr.bf16.mxu0 0
        %1380 = vmatpush1.bf16.msra.mxu0 0
        %1381 = vmatprep.subr.bf16.mxu0 0
        %1382 = vmatpush1.bf16.msra.mxu0 0
        %1383 = vmatprep.mubr.bf16.mxu0 0
        %1384 = vmatmul.mubr.bf16.gmra.mrb[0].mxu0 %v1349
        %v1385 = vpop.f32.mrb[0].mxu0
        %v1386 = vadd.f32 %v1338, %v1385
        %v1387 = vpop.f32.mrb[0].mxu0
        %v1388 = vadd.f32 %v1338, %v1387
        %v1389 = vpop.f32.mrb[0].mxu0
        %v1390 = vadd.f32 %v1343, %v1389
        %v1391 = vpop.f32.mrb[0].mxu0
        %v1392 = vadd.f32 %v1343, %v1391
        %1393 = vdwg.mxu0
        %v1394 = vld [vmem:[%s9] sm:$0xff]
        %1396 = vset.pattern.permute.xlu0 0
        %1397 = vperm.xlu0 %1396, %v1394
        %v1398 = vpop.permute.xlu0 %1397
        %v1400 = vmul.f32 %v1390, %v1398
        %v1401 = vmul.f32 %v1392, %v1398
        %v1402 = vtanh.pop %v1400
        %v1403 = vtanh.pop %v1401
        %v1404 = vld [vmem:[%s8] sm:$0xff]
        %1406 = vset.pattern.permute.xlu0 0
        %1407 = vperm.xlu0 %1406, %v1404
        %v1408 = vpop.permute.xlu0 %1407
        %v1410 = vmul.f32 %v1402, %v1408
        %v1411 = vmul.f32 %v1403, %v1408
        %v1412 = vadd.f32 %v469, %v1386
        %v1413 = vadd.f32 %v470, %v1388
        %v1414 = vmul.f32 %v1410, 1.442695
        %v1415 = vpow.pop %v1414
        %v1416 = vmul.f32 %v1411, 1.442695
        %v1417 = vpow.pop %v1416
        %v1418 = vmul.f32 %v1412, %v1415
        %v1419 = vmul.f32 %v1413, %v1417
        %1420 = vst [vmem:[%s422] sm:$0xff] %v1418
        %1421 = vst [vmem:[%s422 + $0x8] sm:$0xff] %v1419
        %v1422 = vld [vmem:[%s451] sm:$0x3]
        %v1423 = vrot.slane %v1410, 4
        %v1424 = vadd.f32 %v1410, %v1423
        %v1425 = vrot.slane %v1424, 2
        %v1426 = vadd.f32 %v1424, %v1425
        %v1427 = vrot.slane %v1426, 1
        %v1428 = vadd.f32 %v1426, %v1427
        %v1429 = vrot.slane %v1411, 4
        %v1430 = vadd.f32 %v1411, %v1429
        %v1431 = vrot.slane %v1430, 2
        %v1432 = vadd.f32 %v1430, %v1431
        %v1433 = vrot.slane %v1432, 1
        %v1434 = vadd.f32 %v1432, %v1433
        %v1437 = vcombine.low %v1428, %v1434
        %v1439 = vunpack.c.l.s4 1966171168
        %v1440 = vunpack.c.0.s8 %v1439
        %v1441 = vlaneseq
        %v1442 = vshrl.u32 %v1441, 7
        %v1443 = vsub.s32 %v1440, %v1442
        %v1444 = vrot.slane %v1437, %v1443
        %v1446 = vunpack.c.l.s4 1966171168
        %v1447 = vunpack.c.0.s8 %v1446
        %v1448 = vlaneseq
        %v1449 = vshrl.u32 %v1448, 7
        %v1450 = vsub.s32 %v1447, %v1449
        %v1451 = vrot.slane %v1444, %v1450
        %v1453 = vsub.f32 %v1422, %v1451
        %v1454 = vlaneseq
        %vm1455 = vcmp.ge.s32.totalorder %v1454, 0
        %vm1456 = vcmp.lt.s32.totalorder %v1454, 256
        %vm1457 = vmand %vm1455, %vm1456
        %1458 = vst.msk [vmem:[%s429] sm:$0x3] %vm1457, %v1453
        %s1459 = sand.u32 %s257, 1
        %s1460 = scalar_lea.sflag [#allocation3], %s1459
        %s1461 = sand.u32 %s257, 1
        %s1462 = smul.addr %s1461, 16
        %s1463 = scalar_lea.vmem [#allocation2], %s1462
        %s1464 = sand.u32 %s283, 1
        %s1465 = scalar_lea.sflag [#allocation5], %s1464
        %s1466 = sand.u32 %s283, 1
        %s1467 = smul.addr %s1466, 2
        %s1468 = scalar_lea.vmem [#allocation4], %s1467
        // Predicated region
        $region61: #{tpu_custom_call.1} parent=59 // pred_check
          %p1469 = pneg %p267
        $region62: #{tpu_custom_call.1} parent=59 // pred_check_branch
          %1471 = sbr.rel (%p1469) target = $region64
        $region63: #{tpu_custom_call.1} parent=59 // pred_region
          %s1472 = smul.u32 2, %s29
          %s1473 = ssub.s32 3, %s1472
          %p1474 = scmp.lt.s32.totalorder %s1473, 2
          %s1475 = scalar_select %p1474, %s1473, 2
          %s1476 = smul.u32 128, %s1475
          %s1478 = ssub.s32 256, %s1476
          %1479 = vsyncadd %s1460, %s1478
          %p1480 = scmp.ne.s32.totalorder 0, %s1476
          %s1481 = smul.addr %s1472, 128
          %s1482 = scalar_lea.hbm %s10, %s1481
          %s1483 = smul.u32 %s1475, 8
          %s1484 = sshll.u32 %s1483, 4
          %s1485 = sshll.u32 %s1463, 4
          %s1486 = int_to_ptr.vmem [resolvable:$true] %s1485
          %1488 = dma.vmem_to_hbm [thread:$0]  (%p1480), %s1486, %s1484, %s1482, %s1460
        $region64: #{tpu_custom_call.1} parent=59 // pred_fallthru
          _
        // Predicated region
        $region65: #{tpu_custom_call.1} parent=59 // pred_check
          %p1489 = pneg %p293
        $region66: #{tpu_custom_call.1} parent=59 // pred_check_branch
          %1491 = sbr.rel (%p1489) target = $region68
        $region67: #{tpu_custom_call.1} parent=59 // pred_region
          %s1492 = smul.u32 2, %s29
          %s1493 = ssub.s32 3, %s1492
          %p1494 = scmp.lt.s32.totalorder %s1493, 2
          %s1495 = scalar_select %p1494, %s1493, 2
          %s1496 = smul.u32 16, %s1495
          %s1498 = ssub.s32 32, %s1496
          %1499 = vsyncadd %s1465, %s1498
          %p1500 = scmp.ne.s32.totalorder 0, %s1496
          %s1501 = smul.addr %s1492, 16
          %s1502 = scalar_lea.hbm %s11, %s1501
          %s1503 = sshll.u32 %s1495, 4
          %s1504 = sshll.u32 %s1468, 4
          %s1505 = int_to_ptr.vmem [resolvable:$true] %s1504
          %1507 = dma.vmem_to_hbm [thread:$0]  (%p1500), %s1505, %s1503, %s1502, %s1465
        $region68: #{tpu_custom_call.1} parent=59 // pred_fallthru
          _
      $region60: #{tpu_custom_call.1} parent=5 // pred_fallthru
        _
      %p1508 = scmp.le.s32.totalorder 2, %s24
      // Predicated region
      $region69: #{tpu_custom_call.1} parent=5 // pred_check
        %p1509 = pneg %p1508
      $region70: #{tpu_custom_call.1} parent=5 // pred_check_branch
        %1511 = sbr.rel (%p1509) target = $region72
      $region71: #{tpu_custom_call.1} parent=5 // pred_region
        %s1512 = ssub.s32 %s24, 2
        // Predicated region
        $region73: #{tpu_custom_call.1} parent=71 // pred_check
          %p1513 = pneg %p273
        $region74: #{tpu_custom_call.1} parent=71 // pred_check_branch
          %1515 = sbr.rel (%p1513) target = $region76
        $region75: #{tpu_custom_call.1} parent=71 // pred_region
          %s1516 = sand.u32 %s258, 1
          %s1517 = scalar_lea.sflag [#allocation3], %s1516
          %s1518 = sand.u32 %s258, 1
          %s1519 = smul.addr %s1518, 16
          %s1520 = scalar_lea.vmem [#allocation2], %s1519
          %1521 = dma.done %s1517, 256
        $region76: #{tpu_custom_call.1} parent=71 // pred_fallthru
          _
        // Predicated region
        $region77: #{tpu_custom_call.1} parent=71 // pred_check
          %p1522 = pneg %p299
        $region78: #{tpu_custom_call.1} parent=71 // pred_check_branch
          %1524 = sbr.rel (%p1522) target = $region80
        $region79: #{tpu_custom_call.1} parent=71 // pred_region
          %s1525 = sand.u32 %s284, 1
          %s1526 = scalar_lea.sflag [#allocation5], %s1525
          %s1527 = sand.u32 %s284, 1
          %s1528 = smul.addr %s1527, 2
          %s1529 = scalar_lea.vmem [#allocation4], %s1528
          %1530 = dma.done %s1526, 32
        $region80: #{tpu_custom_call.1} parent=71 // pred_fallthru
          _
      $region72: #{tpu_custom_call.1} parent=5 // pred_fallthru
        _
    $region6: #{tpu_custom_call.1} parent=1 // loop_footer
      %s28 = sadd.s32 1, %s24
    $region7: #{tpu_custom_call.1} parent=1 // loop_footer_branch
      %23 = sbr.rel target = $region3
    $region8: #{tpu_custom_call.1} parent=1 // loop_exit
      _
    %1531 = vsyncpa [#allocation3], 1
    %s1532 = scalar_lea.sflag [#allocation3], 1
    %1533 = vsyncpa %s1532, 1
    %1534 = vsyncpa [#allocation5], 1
    %s1535 = scalar_lea.sflag [#allocation5], 1
    %1536 = vsyncpa %s1535, 1

</llo_original>
